<compile_context>
chip_gen: v5e
topology: v5e:2x2
jax: 0.10.0
libtpu: 0.0.40
codegen_flags: <defaults>
</compile_context>

<pallas_src>
import functools

import jax
import jax.numpy as jnp
from jax.experimental import pallas as pl
from jax.experimental.pallas import tpu as pltpu

NEG_SLOPE = 0.2          # GATLayer default negative_slope
MASK_VAL = 1e30          # additive "-inf" stand-in for non-edge logits
LANE = 128               # TPU vreg lane width: keep all lane dims dense
HIGHEST = jax.lax.Precision.HIGHEST


def _round_up(x, m):
    return ((x + m - 1) // m) * m


def _pad2d(a, rows, cols):
    return jnp.pad(a, ((0, rows - a.shape[0]), (0, cols - a.shape[1])))


# ----------------------------------------------------------------------------
# Single fused kernel: all GAT layers + folded post_mp + final softmax.
# ----------------------------------------------------------------------------
def fused_gat_kernel(*refs, num_layers, att_col):
    """refs = (x, adj, [w_aug_l, wal_l] * num_layers, w12, b12, out)."""
    x_ref, adj_ref = refs[0], refs[1]
    layer_refs = refs[2:2 + 2 * num_layers]
    w12_ref, b12_ref = refs[2 + 2 * num_layers], refs[3 + 2 * num_layers]
    o_ref = refs[-1]

    adj = adj_ref[...]                        # [Np, Np] 0/1 mask, adj[dst, src]
    # Additive mask built ONCE and reused by every layer (one VPU pass total).
    neg_mask = (adj - 1.0) * MASK_VAL         # 0 on edges, -1e30 elsewhere

    x = x_ref[...]                            # activations stay in VMEM between layers
    for l in range(num_layers):
        w_aug = layer_refs[2 * l][...]        # [Din_p, Hp]: cols[:C] = W, col C = W @ att_r
        wal = layer_refs[2 * l + 1][...]      # [8, Din_p]: row 0 = (W @ att_l)^T
        # Main projection; alpha_r comes out as column `att_col` of the same matmul,
        # so no separate cross-lane reduction is needed for it.
        xp = jnp.dot(x, w_aug, preferred_element_type=jnp.float32)         # [Np, Hp]
        ar = xp[:, att_col:att_col + 1]                                     # [Np, 1]  (dst logit)
        # Source-side logit directly as a lane-major row via an MXU matmul that
        # contracts the feature axis of both operands -> no XLU transpose of [N,1].
        al = jnp.einsum("kd,nd->kn", wal, x,
                        preferred_element_type=jnp.float32)[0:1, :]         # [1, Np]  (src logit)
        e = ar + al                                                         # [Np, Np]
        e = jnp.maximum(e, NEG_SLOPE * e) + neg_mask                        # leaky_relu + mask
        m = jnp.max(e, axis=-1, keepdims=True)
        p = jnp.exp(e - m) * adj              # *adj keeps isolated / padded dst rows exactly 0
        denom = jnp.maximum(jnp.sum(p, axis=-1, keepdims=True), 1e-30)
        attn = p * pl.reciprocal(denom, approx=True)                        # EUP vrcp
        # Aggregate + fused ReLU (F.relu); dropout is identity in eval mode.
        x = jnp.maximum(jnp.dot(attn, xp, preferred_element_type=jnp.float32), 0.0)

    # post_mp folded to a single Linear (Dropout = id, no activation between the two
    # Linears): y = x @ (W1 @ W2) + (b1 @ W2 + b2), then softmax(dim=1).
    y = jnp.dot(x, w12_ref[...], preferred_element_type=jnp.float32) + b12_ref[...]
    # Padded class columns carry a -1e30 bias -> they vanish from the softmax.
    m = jnp.max(y, axis=-1, keepdims=True)
    py = jnp.exp(y - m)
    o_ref[...] = py * pl.reciprocal(jnp.sum(py, axis=-1, keepdims=True), approx=False)


# ----------------------------------------------------------------------------
# Wrapper: pad everything to lane-dense shapes, run one pallas_call, slice back.
# ----------------------------------------------------------------------------
def gat_forward(x, adj, params, hidden_dim, output_dim):
    n, d_in = x.shape
    num_layers = len(params["convs"])

    n_p = _round_up(n, LANE)                    # node axis: dst sublanes & src lanes of adj/e
    d0_p = _round_up(d_in, LANE)
    h_p = _round_up(hidden_dim + 1, LANE)       # +1 lane carries the folded alpha_r column
    o_p = _round_up(output_dim, LANE)

    x_p = _pad2d(x, n_p, d0_p)
    adj_p = _pad2d(adj, n_p, n_p)

    layer_args = []
    in_p = d0_p
    for (w_t, att_l, att_r) in params["convs"]:
        d_l = w_t.shape[0]
        # Fold the attention vectors into the projection weights (host-side, exact).
        war = jnp.dot(w_t, att_r.T, precision=HIGHEST)[:, 0]     # [d_l]
        wal = jnp.dot(w_t, att_l.T, precision=HIGHEST)[:, 0]     # [d_l]
        w_aug = jnp.zeros((in_p, h_p), jnp.float32)
        w_aug = w_aug.at[:d_l, :hidden_dim].set(w_t)
        w_aug = w_aug.at[:d_l, hidden_dim].set(war)              # alpha_r rides the main matmul
        wal8 = jnp.zeros((8, in_p), jnp.float32).at[0, :d_l].set(wal)
        layer_args += [w_aug, wal8]
        in_p = h_p                                               # carried activation width

    w1_t, b1, w2_t, b2 = params["post_mp"]
    # Fold the two post_mp Linears into one matmul (Dropout between them is identity
    # in eval mode and there is no nonlinearity): exact algebraic rewrite.
    w12 = jnp.dot(w1_t, w2_t, precision=HIGHEST)                 # [hidden, output]
    b12 = jnp.dot(b1, w2_t, precision=HIGHEST) + b2              # [1, output]
    w12_p = _pad2d(w12, h_p, o_p)               # rows >= hidden are 0 -> alpha_r column ignored
    b12_p = jnp.full((1, o_p), -MASK_VAL, jnp.float32).at[0, :output_dim].set(b12[0])

    inputs = [x_p, adj_p, *layer_args, w12_p, b12_p]
    kernel = functools.partial(fused_gat_kernel, num_layers=num_layers, att_col=hidden_dim)
    out_p = pl.pallas_call(
        kernel,
        out_shape=jax.ShapeDtypeStruct((n_p, o_p), jnp.float32),
        in_specs=[pl.BlockSpec(memory_space=pltpu.MemorySpace.VMEM)] * len(inputs),
        out_specs=pl.BlockSpec(memory_space=pltpu.MemorySpace.VMEM),
    )(*inputs)
    return out_p[:n, :output_dim]


# ----------------------------------------------------------------------------
# Pure-JAX reference in the ORIGINAL (unfused, unpadded) math for correctness.
# ----------------------------------------------------------------------------
def gat_forward_ref(x, adj, params):
    for (w_t, att_l, att_r) in params["convs"]:
        xp = x @ w_t
        al = jnp.sum(xp * att_l, axis=-1, keepdims=True)
        ar = jnp.sum(xp * att_r, axis=-1, keepdims=True)
        e = ar + al.T
        e = jnp.where(e >= 0.0, e, NEG_SLOPE * e)
        e = jnp.where(adj > 0.0, e, -MASK_VAL)
        p = jnp.exp(e - jnp.max(e, axis=-1, keepdims=True)) * adj
        attn = p / jnp.maximum(jnp.sum(p, axis=-1, keepdims=True), 1e-30)
        x = jnp.maximum(attn @ xp, 0.0)
    w1_t, b1, w2_t, b2 = params["post_mp"]
    y = (x @ w1_t + b1) @ w2_t + b2
    return jax.nn.softmax(y, axis=1)


# ----------------------------------------------------------------------------
# Deterministic parameter init (xavier-uniform-like, as in reset_parameters)
# ----------------------------------------------------------------------------
def xavier_uniform(key, shape, fan_in, fan_out):
    bound = (6.0 / (fan_in + fan_out)) ** 0.5
    return jax.random.uniform(key, shape, jnp.float32, -bound, bound)


def make_params(key, input_dim, hidden_dim, output_dim, num_layers):
    convs = []
    d_in = input_dim
    for _ in range(num_layers):
        key, k_w, k_al, k_ar = jax.random.split(key, 4)
        w_t = xavier_uniform(k_w, (d_in, hidden_dim), d_in, hidden_dim)   # lin_l.weight.T
        att_l = xavier_uniform(k_al, (1, hidden_dim), hidden_dim, 1)      # att_l (1,1,C)->(1,C)
        att_r = xavier_uniform(k_ar, (1, hidden_dim), hidden_dim, 1)
        convs.append((w_t, att_l, att_r))
        d_in = hidden_dim  # heads(=1) * hidden_dim
    key, k1, k2, kb1, kb2 = jax.random.split(key, 5)
    w1_t = xavier_uniform(k1, (hidden_dim, hidden_dim), hidden_dim, hidden_dim)
    b1 = jax.random.uniform(kb1, (1, hidden_dim), jnp.float32, -0.1, 0.1)
    w2_t = xavier_uniform(k2, (hidden_dim, output_dim), hidden_dim, output_dim)
    b2 = jax.random.uniform(kb2, (1, output_dim), jnp.float32, -0.1, 0.1)
    return {"convs": convs, "post_mp": (w1_t, b1, w2_t, b2)}


# ----------------------------------------------------------------------------
if __name__ == "__main__":
    key = jax.random.PRNGKey(0)

    N, INPUT_DIM, HIDDEN_DIM, OUTPUT_DIM, NUM_LAYERS = 16, 8, 16, 4, 2

    # node features
    key, kx = jax.random.split(key)
    x = jax.random.normal(kx, (N, INPUT_DIM), jnp.float32)

    # deterministic graph: bidirectional ring + self loops -> edge_index [2, E]
    src = jnp.concatenate([jnp.arange(N), jnp.arange(N), jnp.arange(N)])
    dst = jnp.concatenate([(jnp.arange(N) + 1) % N, (jnp.arange(N) - 1) % N, jnp.arange(N)])
    edge_index = jnp.stack([src, dst])                           # [2, E] (src, dst)
    adj = jnp.zeros((N, N), jnp.float32).at[dst, src].set(1.0)   # adj[dst, src] = 1

    params = make_params(key, INPUT_DIM, HIDDEN_DIM, OUTPUT_DIM, NUM_LAYERS)

    out = gat_forward(x, adj, params, HIDDEN_DIM, OUTPUT_DIM)
    out = jax.block_until_ready(out)

    ref = gat_forward_ref(x, adj, params)
    assert out.shape == (N, OUTPUT_DIM)
    # Tolerance accommodates MXU pass-precision / association differences between the
    # Mosaic-lowered f32 matmuls (with the folded post_mp and approx attention
    # reciprocals) and XLA's default-precision dots in the reference.
    assert bool(jnp.allclose(out, ref, atol=1e-2, rtol=1e-2)), "mismatch vs reference"
    assert bool(jnp.allclose(jnp.sum(out, axis=1), 1.0, atol=1e-5)), "softmax rows must sum to 1"
    assert bool(jnp.all((out >= 0.0) & (out <= 1.0))), "probabilities out of range"

    print("KERNEL_OK")
</pallas_src>

<mosaic_0001>
module attributes {stable_mosaic.version = 11 : i64} {
  func.func @fused_gat_kernel(%arg0: memref<128x128xf32, #tpu.memory_space<vmem>>, %arg1: memref<128x128xf32, #tpu.memory_space<vmem>>, %arg2: memref<128x128xf32, #tpu.memory_space<vmem>>, %arg3: memref<8x128xf32, #tpu.memory_space<vmem>>, %arg4: memref<128x128xf32, #tpu.memory_space<vmem>>, %arg5: memref<8x128xf32, #tpu.memory_space<vmem>>, %arg6: memref<128x128xf32, #tpu.memory_space<vmem>>, %arg7: memref<1x128xf32, #tpu.memory_space<vmem>>, %arg8: memref<128x128xf32, #tpu.memory_space<vmem>>) attributes {dimension_semantics = [], scalar_prefetch = 0 : i64, scratch_operands = 0 : i64, tpu.core_type = #tpu.core_type<tc>} {
    %c0 = arith.constant 0 : index
    %c0_0 = arith.constant 0 : index
    %0 = vector.load %arg1[%c0, %c0_0] : memref<128x128xf32, #tpu.memory_space<vmem>>, vector<128x128xf32>
    %cst = arith.constant 1.000000e+00 : f32
    %1 = vector.broadcast %cst : f32 to vector<128x128xf32>
    %2 = arith.subf %0, %1 : vector<128x128xf32>
    %cst_1 = arith.constant 1.000000e+30 : f32
    %3 = vector.broadcast %cst_1 : f32 to vector<128x128xf32>
    %4 = arith.mulf %2, %3 : vector<128x128xf32>
    %c0_2 = arith.constant 0 : index
    %c0_3 = arith.constant 0 : index
    %5 = vector.load %arg0[%c0_2, %c0_3] : memref<128x128xf32, #tpu.memory_space<vmem>>, vector<128x128xf32>
    %c0_4 = arith.constant 0 : index
    %c0_5 = arith.constant 0 : index
    %6 = vector.load %arg2[%c0_4, %c0_5] : memref<128x128xf32, #tpu.memory_space<vmem>>, vector<128x128xf32>
    %c0_6 = arith.constant 0 : index
    %c0_7 = arith.constant 0 : index
    %7 = vector.load %arg3[%c0_6, %c0_7] : memref<8x128xf32, #tpu.memory_space<vmem>>, vector<8x128xf32>
    %cst_8 = arith.constant dense<0.000000e+00> : vector<128x128xf32>
    %8 = tpu.matmul %5, %6, %cst_8 {dimension_numbers = #tpu.dot_dimension_numbers<[1], [0], [0], [1], [0, 0, 1, 1], [], []>} : vector<128x128xf32>, vector<128x128xf32>, vector<128x128xf32> -> vector<128x128xf32>
    %9 = vector.extract_strided_slice %8 {offsets = [0, 16], sizes = [128, 1], strides = [1, 1]} : vector<128x128xf32> to vector<128x1xf32>
    "tpu.trace_start"() <{level = 10 : i32, message = "kd,nd->kn"}> : () -> ()
    %cst_9 = arith.constant dense<0.000000e+00> : vector<8x128xf32>
    %10 = tpu.matmul %7, %5, %cst_9 {dimension_numbers = #tpu.dot_dimension_numbers<[1], [1], [0], [0], [0, 0, 1, 0], [], []>} : vector<8x128xf32>, vector<128x128xf32>, vector<8x128xf32> -> vector<8x128xf32>
    "tpu.trace_stop"() : () -> ()
    %11 = vector.extract_strided_slice %10 {offsets = [0, 0], sizes = [1, 128], strides = [1, 1]} : vector<8x128xf32> to vector<1x128xf32>
    %12 = vector.broadcast %9 : vector<128x1xf32> to vector<128x128xf32>
    %13 = vector.broadcast %11 : vector<1x128xf32> to vector<128x128xf32>
    %14 = arith.addf %12, %13 : vector<128x128xf32>
    %cst_10 = arith.constant 2.000000e-01 : f32
    %15 = vector.broadcast %cst_10 : f32 to vector<128x128xf32>
    %16 = arith.mulf %15, %14 : vector<128x128xf32>
    %17 = arith.maximumf %14, %16 : vector<128x128xf32>
    %18 = arith.addf %17, %4 : vector<128x128xf32>
    %cst_11 = arith.constant dense<0xFF800000> : vector<128xf32>
    %19 = vector.multi_reduction <maximumf>, %18, %cst_11 [1] : vector<128x128xf32> to vector<128xf32>
    %20 = vector.shape_cast %19 : vector<128xf32> to vector<128x1xf32>
    %21 = vector.broadcast %20 : vector<128x1xf32> to vector<128x128xf32>
    %22 = arith.subf %18, %21 : vector<128x128xf32>
    %23 = math.exp %22 : vector<128x128xf32>
    %24 = arith.mulf %23, %0 : vector<128x128xf32>
    %cst_12 = arith.constant dense<0.000000e+00> : vector<128xf32>
    %25 = vector.multi_reduction <add>, %24, %cst_12 [1] : vector<128x128xf32> to vector<128xf32>
    %26 = vector.shape_cast %25 : vector<128xf32> to vector<128x1xf32>
    %cst_13 = arith.constant 1.000000e-30 : f32
    %27 = vector.broadcast %cst_13 : f32 to vector<128x1xf32>
    %28 = arith.maximumf %26, %27 : vector<128x1xf32>
    %29 = tpu.reciprocal %28 {approx = true} : vector<128x1xf32> -> vector<128x1xf32>
    %30 = vector.broadcast %29 : vector<128x1xf32> to vector<128x128xf32>
    %31 = arith.mulf %24, %30 : vector<128x128xf32>
    %cst_14 = arith.constant dense<0.000000e+00> : vector<128x128xf32>
    %32 = tpu.matmul %31, %8, %cst_14 {dimension_numbers = #tpu.dot_dimension_numbers<[1], [0], [0], [1], [0, 0, 1, 1], [], []>} : vector<128x128xf32>, vector<128x128xf32>, vector<128x128xf32> -> vector<128x128xf32>
    %cst_15 = arith.constant 0.000000e+00 : f32
    %33 = vector.broadcast %cst_15 : f32 to vector<128x128xf32>
    %34 = arith.maximumf %32, %33 : vector<128x128xf32>
    %c0_16 = arith.constant 0 : index
    %c0_17 = arith.constant 0 : index
    %35 = vector.load %arg4[%c0_16, %c0_17] : memref<128x128xf32, #tpu.memory_space<vmem>>, vector<128x128xf32>
    %c0_18 = arith.constant 0 : index
    %c0_19 = arith.constant 0 : index
    %36 = vector.load %arg5[%c0_18, %c0_19] : memref<8x128xf32, #tpu.memory_space<vmem>>, vector<8x128xf32>
    %cst_20 = arith.constant dense<0.000000e+00> : vector<128x128xf32>
    %37 = tpu.matmul %34, %35, %cst_20 {dimension_numbers = #tpu.dot_dimension_numbers<[1], [0], [0], [1], [0, 0, 1, 1], [], []>} : vector<128x128xf32>, vector<128x128xf32>, vector<128x128xf32> -> vector<128x128xf32>
    %38 = vector.extract_strided_slice %37 {offsets = [0, 16], sizes = [128, 1], strides = [1, 1]} : vector<128x128xf32> to vector<128x1xf32>
    "tpu.trace_start"() <{level = 10 : i32, message = "kd,nd->kn"}> : () -> ()
    %cst_21 = arith.constant dense<0.000000e+00> : vector<8x128xf32>
    %39 = tpu.matmul %36, %34, %cst_21 {dimension_numbers = #tpu.dot_dimension_numbers<[1], [1], [0], [0], [0, 0, 1, 0], [], []>} : vector<8x128xf32>, vector<128x128xf32>, vector<8x128xf32> -> vector<8x128xf32>
    "tpu.trace_stop"() : () -> ()
    %40 = vector.extract_strided_slice %39 {offsets = [0, 0], sizes = [1, 128], strides = [1, 1]} : vector<8x128xf32> to vector<1x128xf32>
    %41 = vector.broadcast %38 : vector<128x1xf32> to vector<128x128xf32>
    %42 = vector.broadcast %40 : vector<1x128xf32> to vector<128x128xf32>
    %43 = arith.addf %41, %42 : vector<128x128xf32>
    %cst_22 = arith.constant 2.000000e-01 : f32
    %44 = vector.broadcast %cst_22 : f32 to vector<128x128xf32>
    %45 = arith.mulf %44, %43 : vector<128x128xf32>
    %46 = arith.maximumf %43, %45 : vector<128x128xf32>
    %47 = arith.addf %46, %4 : vector<128x128xf32>
    %cst_23 = arith.constant dense<0xFF800000> : vector<128xf32>
    %48 = vector.multi_reduction <maximumf>, %47, %cst_23 [1] : vector<128x128xf32> to vector<128xf32>
    %49 = vector.shape_cast %48 : vector<128xf32> to vector<128x1xf32>
    %50 = vector.broadcast %49 : vector<128x1xf32> to vector<128x128xf32>
    %51 = arith.subf %47, %50 : vector<128x128xf32>
    %52 = math.exp %51 : vector<128x128xf32>
    %53 = arith.mulf %52, %0 : vector<128x128xf32>
    %cst_24 = arith.constant dense<0.000000e+00> : vector<128xf32>
    %54 = vector.multi_reduction <add>, %53, %cst_24 [1] : vector<128x128xf32> to vector<128xf32>
    %55 = vector.shape_cast %54 : vector<128xf32> to vector<128x1xf32>
    %cst_25 = arith.constant 1.000000e-30 : f32
    %56 = vector.broadcast %cst_25 : f32 to vector<128x1xf32>
    %57 = arith.maximumf %55, %56 : vector<128x1xf32>
    %58 = tpu.reciprocal %57 {approx = true} : vector<128x1xf32> -> vector<128x1xf32>
    %59 = vector.broadcast %58 : vector<128x1xf32> to vector<128x128xf32>
    %60 = arith.mulf %53, %59 : vector<128x128xf32>
    %cst_26 = arith.constant dense<0.000000e+00> : vector<128x128xf32>
    %61 = tpu.matmul %60, %37, %cst_26 {dimension_numbers = #tpu.dot_dimension_numbers<[1], [0], [0], [1], [0, 0, 1, 1], [], []>} : vector<128x128xf32>, vector<128x128xf32>, vector<128x128xf32> -> vector<128x128xf32>
    %cst_27 = arith.constant 0.000000e+00 : f32
    %62 = vector.broadcast %cst_27 : f32 to vector<128x128xf32>
    %63 = arith.maximumf %61, %62 : vector<128x128xf32>
    %c0_28 = arith.constant 0 : index
    %c0_29 = arith.constant 0 : index
    %64 = vector.load %arg6[%c0_28, %c0_29] : memref<128x128xf32, #tpu.memory_space<vmem>>, vector<128x128xf32>
    %cst_30 = arith.constant dense<0.000000e+00> : vector<128x128xf32>
    %65 = tpu.matmul %63, %64, %cst_30 {dimension_numbers = #tpu.dot_dimension_numbers<[1], [0], [0], [1], [0, 0, 1, 1], [], []>} : vector<128x128xf32>, vector<128x128xf32>, vector<128x128xf32> -> vector<128x128xf32>
    %c0_31 = arith.constant 0 : index
    %c0_32 = arith.constant 0 : index
    %66 = vector.load %arg7[%c0_31, %c0_32] : memref<1x128xf32, #tpu.memory_space<vmem>>, vector<1x128xf32>
    %67 = vector.broadcast %66 : vector<1x128xf32> to vector<128x128xf32>
    %68 = arith.addf %65, %67 : vector<128x128xf32>
    %cst_33 = arith.constant dense<0xFF800000> : vector<128xf32>
    %69 = vector.multi_reduction <maximumf>, %68, %cst_33 [1] : vector<128x128xf32> to vector<128xf32>
    %70 = vector.shape_cast %69 : vector<128xf32> to vector<128x1xf32>
    %71 = vector.broadcast %70 : vector<128x1xf32> to vector<128x128xf32>
    %72 = arith.subf %68, %71 : vector<128x128xf32>
    %73 = math.exp %72 : vector<128x128xf32>
    %cst_34 = arith.constant dense<0.000000e+00> : vector<128xf32>
    %74 = vector.multi_reduction <add>, %73, %cst_34 [1] : vector<128x128xf32> to vector<128xf32>
    %75 = vector.shape_cast %74 : vector<128xf32> to vector<128x1xf32>
    %76 = tpu.reciprocal %75 : vector<128x1xf32> -> vector<128x1xf32>
    %77 = vector.broadcast %76 : vector<128x1xf32> to vector<128x128xf32>
    %78 = arith.mulf %73, %77 : vector<128x128xf32>
    %c0_35 = arith.constant 0 : index
    %c0_36 = arith.constant 0 : index
    %79 = vector.load %arg8[%c0_35, %c0_36] : memref<128x128xf32, #tpu.memory_space<vmem>>, vector<128x128xf32>
    tpu.vector_store %arg8[%c0_35, %c0_36], %78 {strides = array<i32>} : memref<128x128xf32, #tpu.memory_space<vmem>>, vector<128x128xf32>,
    return
  }
}

</mosaic_0001>

<llo_original>
// kernel: tpu_custom_call.1
$region0: #{tpu_custom_call.1}
  #allocation0 [shape = 'u32[]', space=smem, size = 0x4, offset = 0x4, fixed_abs, tag = 'smem constant byte address 0x4 - core index']
  #allocation1 [shape = 'u32[72,128]{1,0:T(1,128)}', space=vmem, size = 0x9000, scoped, tag = 'internal scratch']
  %s0 = inlined_call_operand.hbm [shape: f32[128,128], index: 0, kind: input, shape index: {}]
  %s1 = inlined_call_operand.hbm [shape: f32[128,128], index: 1, kind: input, shape index: {}]
  %s2 = inlined_call_operand.hbm [shape: f32[128,128], index: 2, kind: input, shape index: {}]
  %s3 = inlined_call_operand.hbm [shape: f32[8,128], index: 3, kind: input, shape index: {}]
  %s4 = inlined_call_operand.hbm [shape: f32[128,128], index: 4, kind: input, shape index: {}]
  %s5 = inlined_call_operand.hbm [shape: f32[8,128], index: 5, kind: input, shape index: {}]
  %s6 = inlined_call_operand.hbm [shape: f32[128,128], index: 6, kind: input, shape index: {}]
  %s7 = inlined_call_operand.vmem [shape: f32[1,128], index: 7, kind: input, shape index: {}]
  %s8 = inlined_call_operand.hbm [shape: f32[128,128], index: 8, kind: output, shape index: {}]
  %s9 = sld [smem:[#allocation0]]
  $region70: #{tpu_custom_call.1} parent=0
    _
  %s11 = ssub.s32 1, %s9
  %s12 = scalar_select 0, %s11, %s9
  $region1: #{tpu_custom_call.1} parent=0
    #allocation2 [shape = 'u8[65536]{0}', space=vmem, size = 0x10000, scoped, tag = 'input window, operand 0, single buffered']
    #allocation3 [shape = 's32[1]{0}', space=sflag, size = 0x4, scoped, tag = 'scoped memory for tpu_custom_call.1']
    #allocation4 [shape = 's32[1]{0}', space=sflag, size = 0x4, scoped, tag = 'scoped memory for tpu_custom_call.1']
    #allocation5 [shape = 'u8[65536]{0}', space=vmem, size = 0x10000, scoped, tag = 'input window, operand 1, single buffered']
    #allocation6 [shape = 's32[1]{0}', space=sflag, size = 0x4, scoped, tag = 'scoped memory for tpu_custom_call.1']
    #allocation7 [shape = 'u8[65536]{0}', space=vmem, size = 0x10000, scoped, tag = 'input window, operand 2, single buffered']
    #allocation8 [shape = 'u8[4096]{0}', space=vmem, size = 0x1000, scoped, tag = 'input window, operand 3, single buffered']
    #allocation9 [shape = 's32[1]{0}', space=sflag, size = 0x4, scoped, tag = 'scoped memory for tpu_custom_call.1']
    #allocation10 [shape = 'u8[65536]{0}', space=vmem, size = 0x10000, scoped, tag = 'input window, operand 4, single buffered']
    #allocation11 [shape = 'u8[4096]{0}', space=vmem, size = 0x1000, scoped, tag = 'input window, operand 5, single buffered']
    #allocation12 [shape = 's32[1]{0}', space=sflag, size = 0x4, scoped, tag = 'scoped memory for tpu_custom_call.1']
    #allocation13 [shape = 'u8[65536]{0}', space=vmem, size = 0x10000, scoped, tag = 'input window, operand 6, single buffered']
    #allocation14 [shape = 'u8[65536]{0}', space=vmem, size = 0x10000, scoped, tag = 'output window, operand 0, single buffered']
    %13 = vsyncpa [#allocation3], 0
    %14 = vsyncpa [#allocation6], 0
    %15 = vsyncpa [#allocation9], 0
    %16 = vsyncpa [#allocation12], 0
    %17 = vsyncpa [#allocation4], 0
    // Predicated region
    $region2: #{tpu_custom_call.1} parent=1 // pred_check
      _
    $region3: #{tpu_custom_call.1} parent=1 // pred_check_branch
      %19 = sbr.rel (0) target = $region5
    $region4: #{tpu_custom_call.1} parent=1 // pred_region
      %21 = vsyncadd [#allocation3], 0
      %s22 = sshll.u32 %s0, 4
      %s23 = int_to_ptr.hbm [resolvable:$true] %s22
      %s24 = sshll.u32 [#allocation2], 4
      %s25 = int_to_ptr.vmem [resolvable:$true] %s24
      %30 = dma.hbm_to_vmem [thread:$0]  %s23, 2048, %s25, [#allocation3], 128, 128, 8
    $region5: #{tpu_custom_call.1} parent=1 // pred_fallthru
      _
    // Predicated region
    $region6: #{tpu_custom_call.1} parent=1 // pred_check
      _
    $region7: #{tpu_custom_call.1} parent=1 // pred_check_branch
      %32 = sbr.rel (0) target = $region9
    $region8: #{tpu_custom_call.1} parent=1 // pred_region
      %34 = vsyncadd [#allocation6], 0
      %s35 = sshll.u32 %s1, 4
      %s36 = int_to_ptr.hbm [resolvable:$true] %s35
      %s37 = sshll.u32 [#allocation5], 4
      %s38 = int_to_ptr.vmem [resolvable:$true] %s37
      %43 = dma.hbm_to_vmem [thread:$0]  %s36, 2048, %s38, [#allocation6], 128, 128, 8
    $region9: #{tpu_custom_call.1} parent=1 // pred_fallthru
      _
    // Predicated region
    $region10: #{tpu_custom_call.1} parent=1 // pred_check
      _
    $region11: #{tpu_custom_call.1} parent=1 // pred_check_branch
      %45 = sbr.rel (0) target = $region13
    $region12: #{tpu_custom_call.1} parent=1 // pred_region
      %47 = vsyncadd [#allocation6], 0
      %s48 = sshll.u32 %s2, 4
      %s49 = int_to_ptr.hbm [resolvable:$true] %s48
      %s50 = sshll.u32 [#allocation7], 4
      %s51 = int_to_ptr.vmem [resolvable:$true] %s50
      %56 = dma.hbm_to_vmem [thread:$0]  %s49, 2048, %s51, [#allocation6], 128, 128, 8
    $region13: #{tpu_custom_call.1} parent=1 // pred_fallthru
      _
    // Predicated region
    $region14: #{tpu_custom_call.1} parent=1 // pred_check
      _
    $region15: #{tpu_custom_call.1} parent=1 // pred_check_branch
      %58 = sbr.rel (0) target = $region17
    $region16: #{tpu_custom_call.1} parent=1 // pred_region
      %60 = vsyncadd [#allocation9], 0
      %s62 = sshll.u32 %s3, 4
      %s63 = int_to_ptr.hbm [resolvable:$true] %s62
      %s64 = sshll.u32 [#allocation8], 4
      %s65 = int_to_ptr.vmem [resolvable:$true] %s64
      %67 = dma.hbm_to_vmem [thread:$0]  %s63, 128, %s65, [#allocation9]
    $region17: #{tpu_custom_call.1} parent=1 // pred_fallthru
      _
    // Predicated region
    $region18: #{tpu_custom_call.1} parent=1 // pred_check
      _
    $region19: #{tpu_custom_call.1} parent=1 // pred_check_branch
      %69 = sbr.rel (0) target = $region21
    $region20: #{tpu_custom_call.1} parent=1 // pred_region
      %71 = vsyncadd [#allocation9], 0
      %s72 = sshll.u32 %s4, 4
      %s73 = int_to_ptr.hbm [resolvable:$true] %s72
      %s74 = sshll.u32 [#allocation10], 4
      %s75 = int_to_ptr.vmem [resolvable:$true] %s74
      %80 = dma.hbm_to_vmem [thread:$0]  %s73, 2048, %s75, [#allocation9], 128, 128, 8
    $region21: #{tpu_custom_call.1} parent=1 // pred_fallthru
      _
    // Predicated region
    $region22: #{tpu_custom_call.1} parent=1 // pred_check
      _
    $region23: #{tpu_custom_call.1} parent=1 // pred_check_branch
      %82 = sbr.rel (0) target = $region25
    $region24: #{tpu_custom_call.1} parent=1 // pred_region
      %84 = vsyncadd [#allocation12], 0
      %s86 = sshll.u32 %s5, 4
      %s87 = int_to_ptr.hbm [resolvable:$true] %s86
      %s88 = sshll.u32 [#allocation11], 4
      %s89 = int_to_ptr.vmem [resolvable:$true] %s88
      %91 = dma.hbm_to_vmem [thread:$0]  %s87, 128, %s89, [#allocation12]
    $region25: #{tpu_custom_call.1} parent=1 // pred_fallthru
      _
    // Predicated region
    $region26: #{tpu_custom_call.1} parent=1 // pred_check
      _
    $region27: #{tpu_custom_call.1} parent=1 // pred_check_branch
      %93 = sbr.rel (0) target = $region29
    $region28: #{tpu_custom_call.1} parent=1 // pred_region
      %95 = vsyncadd [#allocation12], 0
      %s96 = sshll.u32 %s6, 4
      %s97 = int_to_ptr.hbm [resolvable:$true] %s96
      %s98 = sshll.u32 [#allocation13], 4
      %s99 = int_to_ptr.vmem [resolvable:$true] %s98
      %104 = dma.hbm_to_vmem [thread:$0]  %s97, 2048, %s99, [#allocation12], 128, 128, 8
    $region29: #{tpu_custom_call.1} parent=1 // pred_fallthru
      _
    // Predicated region
    $region30: #{tpu_custom_call.1} parent=1 // pred_check
      _
    $region31: #{tpu_custom_call.1} parent=1 // pred_check_branch
      %106 = sbr.rel (0) target = $region33
    $region32: #{tpu_custom_call.1} parent=1 // pred_region
      _
    $region33: #{tpu_custom_call.1} parent=1 // pred_fallthru
      _
    // Predicated region
    $region34: #{tpu_custom_call.1} parent=1 // pred_check
      _
    $region35: #{tpu_custom_call.1} parent=1 // pred_check_branch
      %108 = sbr.rel (0) target = $region37
    $region36: #{tpu_custom_call.1} parent=1 // pred_region
      %110 = dma.done [#allocation3], 2048
    $region37: #{tpu_custom_call.1} parent=1 // pred_fallthru
      _
    // Predicated region
    $region38: #{tpu_custom_call.1} parent=1 // pred_check
      _
    $region39: #{tpu_custom_call.1} parent=1 // pred_check_branch
      %112 = sbr.rel (0) target = $region41
    $region40: #{tpu_custom_call.1} parent=1 // pred_region
      %114 = dma.done [#allocation6], 2048
    $region41: #{tpu_custom_call.1} parent=1 // pred_fallthru
      _
    // Predicated region
    $region42: #{tpu_custom_call.1} parent=1 // pred_check
      _
    $region43: #{tpu_custom_call.1} parent=1 // pred_check_branch
      %116 = sbr.rel (0) target = $region45
    $region44: #{tpu_custom_call.1} parent=1 // pred_region
      %118 = dma.done [#allocation6], 2048
    $region45: #{tpu_custom_call.1} parent=1 // pred_fallthru
      _
    // Predicated region
    $region46: #{tpu_custom_call.1} parent=1 // pred_check
      _
    $region47: #{tpu_custom_call.1} parent=1 // pred_check_branch
      %120 = sbr.rel (0) target = $region49
    $region48: #{tpu_custom_call.1} parent=1 // pred_region
      %122 = dma.done [#allocation9], 128
    $region49: #{tpu_custom_call.1} parent=1 // pred_fallthru
      _
    // Predicated region
    $region50: #{tpu_custom_call.1} parent=1 // pred_check
      _
    $region51: #{tpu_custom_call.1} parent=1 // pred_check_branch
      %124 = sbr.rel (0) target = $region53
    $region52: #{tpu_custom_call.1} parent=1 // pred_region
      %126 = dma.done [#allocation9], 2048
    $region53: #{tpu_custom_call.1} parent=1 // pred_fallthru
      _
    // Predicated region
    $region54: #{tpu_custom_call.1} parent=1 // pred_check
      _
    $region55: #{tpu_custom_call.1} parent=1 // pred_check_branch
      %128 = sbr.rel (0) target = $region57
    $region56: #{tpu_custom_call.1} parent=1 // pred_region
      %130 = dma.done [#allocation12], 128
    $region57: #{tpu_custom_call.1} parent=1 // pred_fallthru
      _
    // Predicated region
    $region58: #{tpu_custom_call.1} parent=1 // pred_check
      _
    $region59: #{tpu_custom_call.1} parent=1 // pred_check_branch
      %132 = sbr.rel (0) target = $region61
    $region60: #{tpu_custom_call.1} parent=1 // pred_region
      %134 = dma.done [#allocation12], 2048
    $region61: #{tpu_custom_call.1} parent=1 // pred_fallthru
      _
    %v135 = vld [vmem:[#allocation5] sm:$0xff]
    %v136 = vld [vmem:[#allocation5 + $0x8] sm:$0xff]
    %v137 = vld [vmem:[#allocation5 + $0x10] sm:$0xff]
    %v138 = vld [vmem:[#allocation5 + $0x18] sm:$0xff]
    %v139 = vld [vmem:[#allocation5 + $0x20] sm:$0xff]
    %v140 = vld [vmem:[#allocation5 + $0x28] sm:$0xff]
    %v141 = vld [vmem:[#allocation5 + $0x30] sm:$0xff]
    %v142 = vld [vmem:[#allocation5 + $0x38] sm:$0xff]
    %v143 = vld [vmem:[#allocation5 + $0x40] sm:$0xff]
    %v144 = vld [vmem:[#allocation5 + $0x48] sm:$0xff]
    %v145 = vld [vmem:[#allocation5 + $0x50] sm:$0xff]
    %v146 = vld [vmem:[#allocation5 + $0x58] sm:$0xff]
    %v147 = vld [vmem:[#allocation5 + $0x60] sm:$0xff]
    %v148 = vld [vmem:[#allocation5 + $0x68] sm:$0xff]
    %v149 = vld [vmem:[#allocation5 + $0x70] sm:$0xff]
    %v150 = vld [vmem:[#allocation5 + $0x78] sm:$0xff]
    %v151 = vsub.f32 %v135, 1.0
    %v152 = vsub.f32 %v136, 1.0
    %v153 = vsub.f32 %v137, 1.0
    %v154 = vsub.f32 %v138, 1.0
    %v155 = vsub.f32 %v139, 1.0
    %v156 = vsub.f32 %v140, 1.0
    %v157 = vsub.f32 %v141, 1.0
    %v158 = vsub.f32 %v142, 1.0
    %v159 = vsub.f32 %v143, 1.0
    %v160 = vsub.f32 %v144, 1.0
    %v161 = vsub.f32 %v145, 1.0
    %v162 = vsub.f32 %v146, 1.0
    %v163 = vsub.f32 %v147, 1.0
    %v164 = vsub.f32 %v148, 1.0
    %v165 = vsub.f32 %v149, 1.0
    %v166 = vsub.f32 %v150, 1.0
    %v167 = vmul.f32 %v151, 1e+30
    %v168 = vmul.f32 %v152, 1e+30
    %v169 = vmul.f32 %v153, 1e+30
    %v170 = vmul.f32 %v154, 1e+30
    %v171 = vmul.f32 %v155, 1e+30
    %v172 = vmul.f32 %v156, 1e+30
    %v173 = vmul.f32 %v157, 1e+30
    %v174 = vmul.f32 %v158, 1e+30
    %v175 = vmul.f32 %v159, 1e+30
    %v176 = vmul.f32 %v160, 1e+30
    %v177 = vmul.f32 %v161, 1e+30
    %v178 = vmul.f32 %v162, 1e+30
    %v179 = vmul.f32 %v163, 1e+30
    %v180 = vmul.f32 %v164, 1e+30
    %v181 = vmul.f32 %v165, 1e+30
    %v182 = vmul.f32 %v166, 1e+30
    %v183 = vld [vmem:[#allocation2] sm:$0xff]
    %v184 = vld [vmem:[#allocation2 + $0x8] sm:$0xff]
    %v185 = vld [vmem:[#allocation2 + $0x10] sm:$0xff]
    %v186 = vld [vmem:[#allocation2 + $0x18] sm:$0xff]
    %v187 = vld [vmem:[#allocation2 + $0x20] sm:$0xff]
    %v188 = vld [vmem:[#allocation2 + $0x28] sm:$0xff]
    %v189 = vld [vmem:[#allocation2 + $0x30] sm:$0xff]
    %v190 = vld [vmem:[#allocation2 + $0x38] sm:$0xff]
    %v191 = vld [vmem:[#allocation2 + $0x40] sm:$0xff]
    %v192 = vld [vmem:[#allocation2 + $0x48] sm:$0xff]
    %v193 = vld [vmem:[#allocation2 + $0x50] sm:$0xff]
    %v194 = vld [vmem:[#allocation2 + $0x58] sm:$0xff]
    %v195 = vld [vmem:[#allocation2 + $0x60] sm:$0xff]
    %v196 = vld [vmem:[#allocation2 + $0x68] sm:$0xff]
    %v197 = vld [vmem:[#allocation2 + $0x70] sm:$0xff]
    %v198 = vld [vmem:[#allocation2 + $0x78] sm:$0xff]
    %v199 = vld [vmem:[#allocation7] sm:$0xff]
    %v200 = vld [vmem:[#allocation7 + $0x8] sm:$0xff]
    %v201 = vld [vmem:[#allocation7 + $0x10] sm:$0xff]
    %v202 = vld [vmem:[#allocation7 + $0x18] sm:$0xff]
    %v203 = vld [vmem:[#allocation7 + $0x20] sm:$0xff]
    %v204 = vld [vmem:[#allocation7 + $0x28] sm:$0xff]
    %v205 = vld [vmem:[#allocation7 + $0x30] sm:$0xff]
    %v206 = vld [vmem:[#allocation7 + $0x38] sm:$0xff]
    %v207 = vld [vmem:[#allocation7 + $0x40] sm:$0xff]
    %v208 = vld [vmem:[#allocation7 + $0x48] sm:$0xff]
    %v209 = vld [vmem:[#allocation7 + $0x50] sm:$0xff]
    %v210 = vld [vmem:[#allocation7 + $0x58] sm:$0xff]
    %v211 = vld [vmem:[#allocation7 + $0x60] sm:$0xff]
    %v212 = vld [vmem:[#allocation7 + $0x68] sm:$0xff]
    %v213 = vld [vmem:[#allocation7 + $0x70] sm:$0xff]
    %v214 = vld [vmem:[#allocation7 + $0x78] sm:$0xff]
    %v215 = vld [vmem:[#allocation8] sm:$0xff]
    %216 = vmatpush.msra.mxu0 %v214
    %217 = vmatpush.msra.mxu0 %v213
    %218 = vmatpush.msra.mxu0 %v212
    %219 = vmatpush.msra.mxu0 %v211
    %220 = vmatpush.msra.mxu0 %v210
    %221 = vmatpush.msra.mxu0 %v209
    %222 = vmatpush.msra.mxu0 %v208
    %223 = vmatpush.msra.mxu0 %v207
    %224 = vmatpush.msra.mxu0 %v206
    %225 = vmatpush.msra.mxu0 %v205
    %226 = vmatpush.msra.mxu0 %v204
    %227 = vmatpush.msra.mxu0 %v203
    %228 = vmatpush.msra.mxu0 %v202
    %229 = vmatpush.msra.mxu0 %v201
    %230 = vmatpush.msra.mxu0 %v200
    %231 = vmatpush.msra.mxu0 %v199
    %232 = vmatmul.f32.gmra.mxu0 %v183
    %v233 = vpop.f32.mrf.mxu0
    %v234 = vadd.f32 0.0, %v233
    %235 = vmatmul.f32.gmra.mxu0 %v184
    %v236 = vpop.f32.mrf.mxu0
    %v237 = vadd.f32 0.0, %v236
    %238 = vmatmul.f32.gmra.mxu0 %v185
    %v239 = vpop.f32.mrf.mxu0
    %v240 = vadd.f32 0.0, %v239
    %241 = vmatmul.f32.gmra.mxu0 %v186
    %v242 = vpop.f32.mrf.mxu0
    %v243 = vadd.f32 0.0, %v242
    %244 = vmatmul.f32.gmra.mxu0 %v187
    %v245 = vpop.f32.mrf.mxu0
    %v246 = vadd.f32 0.0, %v245
    %247 = vmatmul.f32.gmra.mxu0 %v188
    %v248 = vpop.f32.mrf.mxu0
    %v249 = vadd.f32 0.0, %v248
    %250 = vmatmul.f32.gmra.mxu0 %v189
    %v251 = vpop.f32.mrf.mxu0
    %v252 = vadd.f32 0.0, %v251
    %253 = vmatmul.f32.gmra.mxu0 %v190
    %v254 = vpop.f32.mrf.mxu0
    %v255 = vadd.f32 0.0, %v254
    %256 = vmatmul.f32.gmra.mxu0 %v191
    %v257 = vpop.f32.mrf.mxu0
    %v258 = vadd.f32 0.0, %v257
    %259 = vmatmul.f32.gmra.mxu0 %v192
    %v260 = vpop.f32.mrf.mxu0
    %v261 = vadd.f32 0.0, %v260
    %262 = vmatmul.f32.gmra.mxu0 %v193
    %v263 = vpop.f32.mrf.mxu0
    %v264 = vadd.f32 0.0, %v263
    %265 = vmatmul.f32.gmra.mxu0 %v194
    %v266 = vpop.f32.mrf.mxu0
    %v267 = vadd.f32 0.0, %v266
    %268 = vmatmul.f32.gmra.mxu0 %v195
    %v269 = vpop.f32.mrf.mxu0
    %v270 = vadd.f32 0.0, %v269
    %271 = vmatmul.f32.gmra.mxu0 %v196
    %v272 = vpop.f32.mrf.mxu0
    %v273 = vadd.f32 0.0, %v272
    %274 = vmatmul.f32.gmra.mxu0 %v197
    %v275 = vpop.f32.mrf.mxu0
    %v276 = vadd.f32 0.0, %v275
    %277 = vmatmul.f32.gmra.mxu0 %v198
    %v278 = vpop.f32.mrf.mxu0
    %v279 = vadd.f32 0.0, %v278
    %280 = vdwg.mxu0
    %281 = vmatpush.xpose.msra.mxu0 %v198
    %282 = vmatpush.xpose.msra.mxu0 %v197
    %283 = vmatpush.xpose.msra.mxu0 %v196
    %284 = vmatpush.xpose.msra.mxu0 %v195
    %285 = vmatpush.xpose.msra.mxu0 %v194
    %286 = vmatpush.xpose.msra.mxu0 %v193
    %287 = vmatpush.xpose.msra.mxu0 %v192
    %288 = vmatpush.xpose.msra.mxu0 %v191
    %289 = vmatpush.xpose.msra.mxu0 %v190
    %290 = vmatpush.xpose.msra.mxu0 %v189
    %291 = vmatpush.xpose.msra.mxu0 %v188
    %292 = vmatpush.xpose.msra.mxu0 %v187
    %293 = vmatpush.xpose.msra.mxu0 %v186
    %294 = vmatpush.xpose.msra.mxu0 %v185
    %295 = vmatpush.xpose.msra.mxu0 %v184
    %296 = vmatpush.xpose.msra.mxu0 %v183
    %297 = vmatmul.f32.gmra.mxu0 %v215
    %v298 = vpop.f32.mrf.mxu0
    %v299 = vadd.f32 0.0, %v298
    %300 = vdwg.mxu0
    %302 = vset.pattern.permute.xlu0 16
    %303 = vperm.xlu0 %302, %v234
    %v304 = vpop.permute.xlu0 %303
    %307 = vset.pattern.permute.xlu0 16
    %308 = vperm.xlu0 %307, %v237
    %v309 = vpop.permute.xlu0 %308
    %312 = vset.pattern.permute.xlu0 16
    %313 = vperm.xlu0 %312, %v240
    %v314 = vpop.permute.xlu0 %313
    %317 = vset.pattern.permute.xlu0 16
    %318 = vperm.xlu0 %317, %v243
    %v319 = vpop.permute.xlu0 %318
    %322 = vset.pattern.permute.xlu0 16
    %323 = vperm.xlu0 %322, %v246
    %v324 = vpop.permute.xlu0 %323
    %327 = vset.pattern.permute.xlu0 16
    %328 = vperm.xlu0 %327, %v249
    %v329 = vpop.permute.xlu0 %328
    %332 = vset.pattern.permute.xlu0 16
    %333 = vperm.xlu0 %332, %v252
    %v334 = vpop.permute.xlu0 %333
    %337 = vset.pattern.permute.xlu0 16
    %338 = vperm.xlu0 %337, %v255
    %v339 = vpop.permute.xlu0 %338
    %342 = vset.pattern.permute.xlu0 16
    %343 = vperm.xlu0 %342, %v258
    %v344 = vpop.permute.xlu0 %343
    %347 = vset.pattern.permute.xlu0 16
    %348 = vperm.xlu0 %347, %v261
    %v349 = vpop.permute.xlu0 %348
    %352 = vset.pattern.permute.xlu0 16
    %353 = vperm.xlu0 %352, %v264
    %v354 = vpop.permute.xlu0 %353
    %357 = vset.pattern.permute.xlu0 16
    %358 = vperm.xlu0 %357, %v267
    %v359 = vpop.permute.xlu0 %358
    %362 = vset.pattern.permute.xlu0 16
    %363 = vperm.xlu0 %362, %v270
    %v364 = vpop.permute.xlu0 %363
    %367 = vset.pattern.permute.xlu0 16
    %368 = vperm.xlu0 %367, %v273
    %v369 = vpop.permute.xlu0 %368
    %372 = vset.pattern.permute.xlu0 16
    %373 = vperm.xlu0 %372, %v276
    %v374 = vpop.permute.xlu0 %373
    %377 = vset.pattern.permute.xlu0 16
    %378 = vperm.xlu0 %377, %v279
    %v379 = vpop.permute.xlu0 %378
    %v381 = vperm.slane %v299, 0
    %v382 = vadd.f32 %v304, %v381
    %v383 = vadd.f32 %v309, %v381
    %v384 = vadd.f32 %v314, %v381
    %v385 = vadd.f32 %v319, %v381
    %v386 = vadd.f32 %v324, %v381
    %v387 = vadd.f32 %v329, %v381
    %v388 = vadd.f32 %v334, %v381
    %v389 = vadd.f32 %v339, %v381
    %v390 = vadd.f32 %v344, %v381
    %v391 = vadd.f32 %v349, %v381
    %v392 = vadd.f32 %v354, %v381
    %v393 = vadd.f32 %v359, %v381
    %v394 = vadd.f32 %v364, %v381
    %v395 = vadd.f32 %v369, %v381
    %v396 = vadd.f32 %v374, %v381
    %v397 = vadd.f32 %v379, %v381
    %v398 = vmul.f32 %v382, 0.2
    %v399 = vmul.f32 %v383, 0.2
    %v400 = vmul.f32 %v384, 0.2
    %v401 = vmul.f32 %v385, 0.2
    %v402 = vmul.f32 %v386, 0.2
    %v403 = vmul.f32 %v387, 0.2
    %v404 = vmul.f32 %v388, 0.2
    %v405 = vmul.f32 %v389, 0.2
    %v406 = vmul.f32 %v390, 0.2
    %v407 = vmul.f32 %v391, 0.2
    %v408 = vmul.f32 %v392, 0.2
    %v409 = vmul.f32 %v393, 0.2
    %v410 = vmul.f32 %v394, 0.2
    %v411 = vmul.f32 %v395, 0.2
    %v412 = vmul.f32 %v396, 0.2
    %v413 = vmul.f32 %v397, 0.2
    %v414 = vmax.f32 %v382, %v398
    %v415 = vmax.f32 %v383, %v399
    %v416 = vmax.f32 %v384, %v400
    %v417 = vmax.f32 %v385, %v401
    %v418 = vmax.f32 %v386, %v402
    %v419 = vmax.f32 %v387, %v403
    %v420 = vmax.f32 %v388, %v404
    %v421 = vmax.f32 %v389, %v405
    %v422 = vmax.f32 %v390, %v406
    %v423 = vmax.f32 %v391, %v407
    %v424 = vmax.f32 %v392, %v408
    %v425 = vmax.f32 %v393, %v409
    %v426 = vmax.f32 %v394, %v410
    %v427 = vmax.f32 %v395, %v411
    %v428 = vmax.f32 %v396, %v412
    %v429 = vmax.f32 %v397, %v413
    %v430 = vadd.f32 %v414, %v167
    %v431 = vadd.f32 %v415, %v168
    %v432 = vadd.f32 %v416, %v169
    %v433 = vadd.f32 %v417, %v170
    %v434 = vadd.f32 %v418, %v171
    %v435 = vadd.f32 %v419, %v172
    %v436 = vadd.f32 %v420, %v173
    %v437 = vadd.f32 %v421, %v174
    %v438 = vadd.f32 %v422, %v175
    %v439 = vadd.f32 %v423, %v176
    %v440 = vadd.f32 %v424, %v177
    %v441 = vadd.f32 %v425, %v178
    %v442 = vadd.f32 %v426, %v179
    %v443 = vadd.f32 %v427, %v180
    %v444 = vadd.f32 %v428, %v181
    %v445 = vadd.f32 %v429, %v182
    %446 = vmax.xlane.f32.xlu0 %v430
    %v447 = vpop.xlane.xlu0 %446
    %448 = vmax.xlane.f32.xlu0 %v431
    %v449 = vpop.xlane.xlu0 %448
    %450 = vmax.xlane.f32.xlu0 %v432
    %v451 = vpop.xlane.xlu0 %450
    %452 = vmax.xlane.f32.xlu0 %v433
    %v453 = vpop.xlane.xlu0 %452
    %454 = vmax.xlane.f32.xlu0 %v434
    %v455 = vpop.xlane.xlu0 %454
    %456 = vmax.xlane.f32.xlu0 %v435
    %v457 = vpop.xlane.xlu0 %456
    %458 = vmax.xlane.f32.xlu0 %v436
    %v459 = vpop.xlane.xlu0 %458
    %460 = vmax.xlane.f32.xlu0 %v437
    %v461 = vpop.xlane.xlu0 %460
    %462 = vmax.xlane.f32.xlu0 %v438
    %v463 = vpop.xlane.xlu0 %462
    %464 = vmax.xlane.f32.xlu0 %v439
    %v465 = vpop.xlane.xlu0 %464
    %466 = vmax.xlane.f32.xlu0 %v440
    %v467 = vpop.xlane.xlu0 %466
    %468 = vmax.xlane.f32.xlu0 %v441
    %v469 = vpop.xlane.xlu0 %468
    %470 = vmax.xlane.f32.xlu0 %v442
    %v471 = vpop.xlane.xlu0 %470
    %472 = vmax.xlane.f32.xlu0 %v443
    %v473 = vpop.xlane.xlu0 %472
    %474 = vmax.xlane.f32.xlu0 %v444
    %v475 = vpop.xlane.xlu0 %474
    %476 = vmax.xlane.f32.xlu0 %v445
    %v477 = vpop.xlane.xlu0 %476
    %v478 = vsub.f32 %v430, %v447
    %v479 = vsub.f32 %v431, %v449
    %v480 = vsub.f32 %v432, %v451
    %v481 = vsub.f32 %v433, %v453
    %v482 = vsub.f32 %v434, %v455
    %v483 = vsub.f32 %v435, %v457
    %v484 = vsub.f32 %v436, %v459
    %v485 = vsub.f32 %v437, %v461
    %v486 = vsub.f32 %v438, %v463
    %v487 = vsub.f32 %v439, %v465
    %v488 = vsub.f32 %v440, %v467
    %v489 = vsub.f32 %v441, %v469
    %v490 = vsub.f32 %v442, %v471
    %v491 = vsub.f32 %v443, %v473
    %v492 = vsub.f32 %v444, %v475
    %v493 = vsub.f32 %v445, %v477
    %v494 = vmul.f32 %v478, 1.442695
    %v495 = vpow.pop %v494
    %v496 = vmul.f32 %v479, 1.442695
    %v497 = vpow.pop %v496
    %v498 = vmul.f32 %v480, 1.442695
    %v499 = vpow.pop %v498
    %v500 = vmul.f32 %v481, 1.442695
    %v501 = vpow.pop %v500
    %v502 = vmul.f32 %v482, 1.442695
    %v503 = vpow.pop %v502
    %v504 = vmul.f32 %v483, 1.442695
    %v505 = vpow.pop %v504
    %v506 = vmul.f32 %v484, 1.442695
    %v507 = vpow.pop %v506
    %v508 = vmul.f32 %v485, 1.442695
    %v509 = vpow.pop %v508
    %v510 = vmul.f32 %v486, 1.442695
    %v511 = vpow.pop %v510
    %v512 = vmul.f32 %v487, 1.442695
    %v513 = vpow.pop %v512
    %v514 = vmul.f32 %v488, 1.442695
    %v515 = vpow.pop %v514
    %v516 = vmul.f32 %v489, 1.442695
    %v517 = vpow.pop %v516
    %v518 = vmul.f32 %v490, 1.442695
    %v519 = vpow.pop %v518
    %v520 = vmul.f32 %v491, 1.442695
    %v521 = vpow.pop %v520
    %v522 = vmul.f32 %v492, 1.442695
    %v523 = vpow.pop %v522
    %v524 = vmul.f32 %v493, 1.442695
    %v525 = vpow.pop %v524
    %v526 = vmul.f32 %v495, %v135
    %v527 = vmul.f32 %v497, %v136
    %v528 = vmul.f32 %v499, %v137
    %v529 = vmul.f32 %v501, %v138
    %v530 = vmul.f32 %v503, %v139
    %v531 = vmul.f32 %v505, %v140
    %v532 = vmul.f32 %v507, %v141
    %v533 = vmul.f32 %v509, %v142
    %v534 = vmul.f32 %v511, %v143
    %v535 = vmul.f32 %v513, %v144
    %v536 = vmul.f32 %v515, %v145
    %v537 = vmul.f32 %v517, %v146
    %v538 = vmul.f32 %v519, %v147
    %v539 = vmul.f32 %v521, %v148
    %v540 = vmul.f32 %v523, %v149
    %v541 = vmul.f32 %v525, %v150
    %542 = vadd.xlane.f32.xlu0 %v526
    %v543 = vpop.xlane.xlu0 %542
    %544 = vadd.xlane.f32.xlu0 %v527
    %v545 = vpop.xlane.xlu0 %544
    %546 = vadd.xlane.f32.xlu0 %v528
    %v547 = vpop.xlane.xlu0 %546
    %548 = vadd.xlane.f32.xlu0 %v529
    %v549 = vpop.xlane.xlu0 %548
    %550 = vadd.xlane.f32.xlu0 %v530
    %v551 = vpop.xlane.xlu0 %550
    %552 = vadd.xlane.f32.xlu0 %v531
    %v553 = vpop.xlane.xlu0 %552
    %554 = vadd.xlane.f32.xlu0 %v532
    %v555 = vpop.xlane.xlu0 %554
    %556 = vadd.xlane.f32.xlu0 %v533
    %v557 = vpop.xlane.xlu0 %556
    %558 = vadd.xlane.f32.xlu0 %v534
    %v559 = vpop.xlane.xlu0 %558
    %560 = vadd.xlane.f32.xlu0 %v535
    %v561 = vpop.xlane.xlu0 %560
    %562 = vadd.xlane.f32.xlu0 %v536
    %v563 = vpop.xlane.xlu0 %562
    %564 = vadd.xlane.f32.xlu0 %v537
    %v565 = vpop.xlane.xlu0 %564
    %566 = vadd.xlane.f32.xlu0 %v538
    %v567 = vpop.xlane.xlu0 %566
    %568 = vadd.xlane.f32.xlu0 %v539
    %v569 = vpop.xlane.xlu0 %568
    %570 = vadd.xlane.f32.xlu0 %v540
    %v571 = vpop.xlane.xlu0 %570
    %572 = vadd.xlane.f32.xlu0 %v541
    %v573 = vpop.xlane.xlu0 %572
    %v574 = vmax.f32 %v543, 1e-30
    %v575 = vmax.f32 %v545, 1e-30
    %v576 = vmax.f32 %v547, 1e-30
    %v577 = vmax.f32 %v549, 1e-30
    %v578 = vmax.f32 %v551, 1e-30
    %v579 = vmax.f32 %v553, 1e-30
    %v580 = vmax.f32 %v555, 1e-30
    %v581 = vmax.f32 %v557, 1e-30
    %v582 = vmax.f32 %v559, 1e-30
    %v583 = vmax.f32 %v561, 1e-30
    %v584 = vmax.f32 %v563, 1e-30
    %v585 = vmax.f32 %v565, 1e-30
    %v586 = vmax.f32 %v567, 1e-30
    %v587 = vmax.f32 %v569, 1e-30
    %v588 = vmax.f32 %v571, 1e-30
    %v589 = vmax.f32 %v573, 1e-30
    %v590 = vrcp.pop %v574
    %v591 = vrcp.pop %v575
    %v592 = vrcp.pop %v576
    %v593 = vrcp.pop %v577
    %v594 = vrcp.pop %v578
    %v595 = vrcp.pop %v579
    %v596 = vrcp.pop %v580
    %v597 = vrcp.pop %v581
    %v598 = vrcp.pop %v582
    %v599 = vrcp.pop %v583
    %v600 = vrcp.pop %v584
    %v601 = vrcp.pop %v585
    %v602 = vrcp.pop %v586
    %v603 = vrcp.pop %v587
    %v604 = vrcp.pop %v588
    %v605 = vrcp.pop %v589
    %v606 = vmul.f32 %v526, %v590
    %v607 = vmul.f32 %v527, %v591
    %v608 = vmul.f32 %v528, %v592
    %v609 = vmul.f32 %v529, %v593
    %v610 = vmul.f32 %v530, %v594
    %v611 = vmul.f32 %v531, %v595
    %v612 = vmul.f32 %v532, %v596
    %v613 = vmul.f32 %v533, %v597
    %v614 = vmul.f32 %v534, %v598
    %v615 = vmul.f32 %v535, %v599
    %v616 = vmul.f32 %v536, %v600
    %v617 = vmul.f32 %v537, %v601
    %v618 = vmul.f32 %v538, %v602
    %v619 = vmul.f32 %v539, %v603
    %v620 = vmul.f32 %v540, %v604
    %v621 = vmul.f32 %v541, %v605
    %622 = vmatpush.msra.mxu0 %v279
    %623 = vmatpush.msra.mxu0 %v276
    %624 = vmatpush.msra.mxu0 %v273
    %625 = vmatpush.msra.mxu0 %v270
    %626 = vmatpush.msra.mxu0 %v267
    %627 = vmatpush.msra.mxu0 %v264
    %628 = vmatpush.msra.mxu0 %v261
    %629 = vmatpush.msra.mxu0 %v258
    %630 = vmatpush.msra.mxu0 %v255
    %631 = vmatpush.msra.mxu0 %v252
    %632 = vmatpush.msra.mxu0 %v249
    %633 = vmatpush.msra.mxu0 %v246
    %634 = vmatpush.msra.mxu0 %v243
    %635 = vmatpush.msra.mxu0 %v240
    %636 = vmatpush.msra.mxu0 %v237
    %637 = vmatpush.msra.mxu0 %v234
    %638 = vmatmul.f32.gmra.mxu0 %v606
    %v639 = vpop.f32.mrf.mxu0
    %v640 = vadd.f32 0.0, %v639
    %641 = vmatmul.f32.gmra.mxu0 %v607
    %v642 = vpop.f32.mrf.mxu0
    %v643 = vadd.f32 0.0, %v642
    %644 = vmatmul.f32.gmra.mxu0 %v608
    %v645 = vpop.f32.mrf.mxu0
    %v646 = vadd.f32 0.0, %v645
    %647 = vmatmul.f32.gmra.mxu0 %v609
    %v648 = vpop.f32.mrf.mxu0
    %v649 = vadd.f32 0.0, %v648
    %650 = vmatmul.f32.gmra.mxu0 %v610
    %v651 = vpop.f32.mrf.mxu0
    %v652 = vadd.f32 0.0, %v651
    %653 = vmatmul.f32.gmra.mxu0 %v611
    %v654 = vpop.f32.mrf.mxu0
    %v655 = vadd.f32 0.0, %v654
    %656 = vmatmul.f32.gmra.mxu0 %v612
    %v657 = vpop.f32.mrf.mxu0
    %v658 = vadd.f32 0.0, %v657
    %659 = vmatmul.f32.gmra.mxu0 %v613
    %v660 = vpop.f32.mrf.mxu0
    %v661 = vadd.f32 0.0, %v660
    %662 = vmatmul.f32.gmra.mxu0 %v614
    %v663 = vpop.f32.mrf.mxu0
    %v664 = vadd.f32 0.0, %v663
    %665 = vmatmul.f32.gmra.mxu0 %v615
    %v666 = vpop.f32.mrf.mxu0
    %v667 = vadd.f32 0.0, %v666
    %668 = vmatmul.f32.gmra.mxu0 %v616
    %v669 = vpop.f32.mrf.mxu0
    %v670 = vadd.f32 0.0, %v669
    %671 = vmatmul.f32.gmra.mxu0 %v617
    %v672 = vpop.f32.mrf.mxu0
    %v673 = vadd.f32 0.0, %v672
    %674 = vmatmul.f32.gmra.mxu0 %v618
    %v675 = vpop.f32.mrf.mxu0
    %v676 = vadd.f32 0.0, %v675
    %677 = vmatmul.f32.gmra.mxu0 %v619
    %v678 = vpop.f32.mrf.mxu0
    %v679 = vadd.f32 0.0, %v678
    %680 = vmatmul.f32.gmra.mxu0 %v620
    %v681 = vpop.f32.mrf.mxu0
    %v682 = vadd.f32 0.0, %v681
    %683 = vmatmul.f32.gmra.mxu0 %v621
    %v684 = vpop.f32.mrf.mxu0
    %v685 = vadd.f32 0.0, %v684
    %686 = vdwg.mxu0
    %v687 = vmax.f32 %v640, 0.0
    %v688 = vmax.f32 %v643, 0.0
    %v689 = vmax.f32 %v646, 0.0
    %v690 = vmax.f32 %v649, 0.0
    %v691 = vmax.f32 %v652, 0.0
    %v692 = vmax.f32 %v655, 0.0
    %v693 = vmax.f32 %v658, 0.0
    %v694 = vmax.f32 %v661, 0.0
    %v695 = vmax.f32 %v664, 0.0
    %v696 = vmax.f32 %v667, 0.0
    %v697 = vmax.f32 %v670, 0.0
    %v698 = vmax.f32 %v673, 0.0
    %v699 = vmax.f32 %v676, 0.0
    %v700 = vmax.f32 %v679, 0.0
    %v701 = vmax.f32 %v682, 0.0
    %v702 = vmax.f32 %v685, 0.0
    %v703 = vld [vmem:[#allocation10] sm:$0xff]
    %v704 = vld [vmem:[#allocation10 + $0x8] sm:$0xff]
    %v705 = vld [vmem:[#allocation10 + $0x10] sm:$0xff]
    %v706 = vld [vmem:[#allocation10 + $0x18] sm:$0xff]
    %v707 = vld [vmem:[#allocation10 + $0x20] sm:$0xff]
    %v708 = vld [vmem:[#allocation10 + $0x28] sm:$0xff]
    %v709 = vld [vmem:[#allocation10 + $0x30] sm:$0xff]
    %v710 = vld [vmem:[#allocation10 + $0x38] sm:$0xff]
    %v711 = vld [vmem:[#allocation10 + $0x40] sm:$0xff]
    %v712 = vld [vmem:[#allocation10 + $0x48] sm:$0xff]
    %v713 = vld [vmem:[#allocation10 + $0x50] sm:$0xff]
    %v714 = vld [vmem:[#allocation10 + $0x58] sm:$0xff]
    %v715 = vld [vmem:[#allocation10 + $0x60] sm:$0xff]
    %v716 = vld [vmem:[#allocation10 + $0x68] sm:$0xff]
    %v717 = vld [vmem:[#allocation10 + $0x70] sm:$0xff]
    %v718 = vld [vmem:[#allocation10 + $0x78] sm:$0xff]
    %v719 = vld [vmem:[#allocation11] sm:$0xff]
    %720 = vmatpush.msra.mxu0 %v718
    %721 = vmatpush.msra.mxu0 %v717
    %722 = vmatpush.msra.mxu0 %v716
    %723 = vmatpush.msra.mxu0 %v715
    %724 = vmatpush.msra.mxu0 %v714
    %725 = vmatpush.msra.mxu0 %v713
    %726 = vmatpush.msra.mxu0 %v712
    %727 = vmatpush.msra.mxu0 %v711
    %728 = vmatpush.msra.mxu0 %v710
    %729 = vmatpush.msra.mxu0 %v709
    %730 = vmatpush.msra.mxu0 %v708
    %731 = vmatpush.msra.mxu0 %v707
    %732 = vmatpush.msra.mxu0 %v706
    %733 = vmatpush.msra.mxu0 %v705
    %734 = vmatpush.msra.mxu0 %v704
    %735 = vmatpush.msra.mxu0 %v703
    %736 = vmatmul.f32.gmra.mxu0 %v687
    %v737 = vpop.f32.mrf.mxu0
    %v738 = vadd.f32 0.0, %v737
    %739 = vmatmul.f32.gmra.mxu0 %v688
    %v740 = vpop.f32.mrf.mxu0
    %v741 = vadd.f32 0.0, %v740
    %742 = vmatmul.f32.gmra.mxu0 %v689
    %v743 = vpop.f32.mrf.mxu0
    %v744 = vadd.f32 0.0, %v743
    %745 = vmatmul.f32.gmra.mxu0 %v690
    %v746 = vpop.f32.mrf.mxu0
    %v747 = vadd.f32 0.0, %v746
    %748 = vmatmul.f32.gmra.mxu0 %v691
    %v749 = vpop.f32.mrf.mxu0
    %v750 = vadd.f32 0.0, %v749
    %751 = vmatmul.f32.gmra.mxu0 %v692
    %v752 = vpop.f32.mrf.mxu0
    %v753 = vadd.f32 0.0, %v752
    %754 = vmatmul.f32.gmra.mxu0 %v693
    %v755 = vpop.f32.mrf.mxu0
    %v756 = vadd.f32 0.0, %v755
    %757 = vmatmul.f32.gmra.mxu0 %v694
    %v758 = vpop.f32.mrf.mxu0
    %v759 = vadd.f32 0.0, %v758
    %760 = vmatmul.f32.gmra.mxu0 %v695
    %v761 = vpop.f32.mrf.mxu0
    %v762 = vadd.f32 0.0, %v761
    %763 = vmatmul.f32.gmra.mxu0 %v696
    %v764 = vpop.f32.mrf.mxu0
    %v765 = vadd.f32 0.0, %v764
    %766 = vmatmul.f32.gmra.mxu0 %v697
    %v767 = vpop.f32.mrf.mxu0
    %v768 = vadd.f32 0.0, %v767
    %769 = vmatmul.f32.gmra.mxu0 %v698
    %v770 = vpop.f32.mrf.mxu0
    %v771 = vadd.f32 0.0, %v770
    %772 = vmatmul.f32.gmra.mxu0 %v699
    %v773 = vpop.f32.mrf.mxu0
    %v774 = vadd.f32 0.0, %v773
    %775 = vmatmul.f32.gmra.mxu0 %v700
    %v776 = vpop.f32.mrf.mxu0
    %v777 = vadd.f32 0.0, %v776
    %778 = vmatmul.f32.gmra.mxu0 %v701
    %v779 = vpop.f32.mrf.mxu0
    %v780 = vadd.f32 0.0, %v779
    %781 = vmatmul.f32.gmra.mxu0 %v702
    %v782 = vpop.f32.mrf.mxu0
    %v783 = vadd.f32 0.0, %v782
    %784 = vdwg.mxu0
    %785 = vmatpush.xpose.msra.mxu0 %v702
    %786 = vmatpush.xpose.msra.mxu0 %v701
    %787 = vmatpush.xpose.msra.mxu0 %v700
    %788 = vmatpush.xpose.msra.mxu0 %v699
    %789 = vmatpush.xpose.msra.mxu0 %v698
    %790 = vmatpush.xpose.msra.mxu0 %v697
    %791 = vmatpush.xpose.msra.mxu0 %v696
    %792 = vmatpush.xpose.msra.mxu0 %v695
    %793 = vmatpush.xpose.msra.mxu0 %v694
    %794 = vmatpush.xpose.msra.mxu0 %v693
    %795 = vmatpush.xpose.msra.mxu0 %v692
    %796 = vmatpush.xpose.msra.mxu0 %v691
    %797 = vmatpush.xpose.msra.mxu0 %v690
    %798 = vmatpush.xpose.msra.mxu0 %v689
    %799 = vmatpush.xpose.msra.mxu0 %v688
    %800 = vmatpush.xpose.msra.mxu0 %v687
    %801 = vmatmul.f32.gmra.mxu0 %v719
    %v802 = vpop.f32.mrf.mxu0
    %v803 = vadd.f32 0.0, %v802
    %804 = vdwg.mxu0
    %806 = vset.pattern.permute.xlu0 16
    %807 = vperm.xlu0 %806, %v738
    %v808 = vpop.permute.xlu0 %807
    %811 = vset.pattern.permute.xlu0 16
    %812 = vperm.xlu0 %811, %v741
    %v813 = vpop.permute.xlu0 %812
    %816 = vset.pattern.permute.xlu0 16
    %817 = vperm.xlu0 %816, %v744
    %v818 = vpop.permute.xlu0 %817
    %821 = vset.pattern.permute.xlu0 16
    %822 = vperm.xlu0 %821, %v747
    %v823 = vpop.permute.xlu0 %822
    %826 = vset.pattern.permute.xlu0 16
    %827 = vperm.xlu0 %826, %v750
    %v828 = vpop.permute.xlu0 %827
    %831 = vset.pattern.permute.xlu0 16
    %832 = vperm.xlu0 %831, %v753
    %v833 = vpop.permute.xlu0 %832
    %836 = vset.pattern.permute.xlu0 16
    %837 = vperm.xlu0 %836, %v756
    %v838 = vpop.permute.xlu0 %837
    %841 = vset.pattern.permute.xlu0 16
    %842 = vperm.xlu0 %841, %v759
    %v843 = vpop.permute.xlu0 %842
    %846 = vset.pattern.permute.xlu0 16
    %847 = vperm.xlu0 %846, %v762
    %v848 = vpop.permute.xlu0 %847
    %851 = vset.pattern.permute.xlu0 16
    %852 = vperm.xlu0 %851, %v765
    %v853 = vpop.permute.xlu0 %852
    %856 = vset.pattern.permute.xlu0 16
    %857 = vperm.xlu0 %856, %v768
    %v858 = vpop.permute.xlu0 %857
    %861 = vset.pattern.permute.xlu0 16
    %862 = vperm.xlu0 %861, %v771
    %v863 = vpop.permute.xlu0 %862
    %866 = vset.pattern.permute.xlu0 16
    %867 = vperm.xlu0 %866, %v774
    %v868 = vpop.permute.xlu0 %867
    %871 = vset.pattern.permute.xlu0 16
    %872 = vperm.xlu0 %871, %v777
    %v873 = vpop.permute.xlu0 %872
    %876 = vset.pattern.permute.xlu0 16
    %877 = vperm.xlu0 %876, %v780
    %v878 = vpop.permute.xlu0 %877
    %881 = vset.pattern.permute.xlu0 16
    %882 = vperm.xlu0 %881, %v783
    %v883 = vpop.permute.xlu0 %882
    %v885 = vperm.slane %v803, 0
    %v886 = vadd.f32 %v808, %v885
    %v887 = vadd.f32 %v813, %v885
    %v888 = vadd.f32 %v818, %v885
    %v889 = vadd.f32 %v823, %v885
    %v890 = vadd.f32 %v828, %v885
    %v891 = vadd.f32 %v833, %v885
    %v892 = vadd.f32 %v838, %v885
    %v893 = vadd.f32 %v843, %v885
    %v894 = vadd.f32 %v848, %v885
    %v895 = vadd.f32 %v853, %v885
    %v896 = vadd.f32 %v858, %v885
    %v897 = vadd.f32 %v863, %v885
    %v898 = vadd.f32 %v868, %v885
    %v899 = vadd.f32 %v873, %v885
    %v900 = vadd.f32 %v878, %v885
    %v901 = vadd.f32 %v883, %v885
    %v902 = vmul.f32 %v886, 0.2
    %v903 = vmul.f32 %v887, 0.2
    %v904 = vmul.f32 %v888, 0.2
    %v905 = vmul.f32 %v889, 0.2
    %v906 = vmul.f32 %v890, 0.2
    %v907 = vmul.f32 %v891, 0.2
    %v908 = vmul.f32 %v892, 0.2
    %v909 = vmul.f32 %v893, 0.2
    %v910 = vmul.f32 %v894, 0.2
    %v911 = vmul.f32 %v895, 0.2
    %v912 = vmul.f32 %v896, 0.2
    %v913 = vmul.f32 %v897, 0.2
    %v914 = vmul.f32 %v898, 0.2
    %v915 = vmul.f32 %v899, 0.2
    %v916 = vmul.f32 %v900, 0.2
    %v917 = vmul.f32 %v901, 0.2
    %v918 = vmax.f32 %v886, %v902
    %v919 = vmax.f32 %v887, %v903
    %v920 = vmax.f32 %v888, %v904
    %v921 = vmax.f32 %v889, %v905
    %v922 = vmax.f32 %v890, %v906
    %v923 = vmax.f32 %v891, %v907
    %v924 = vmax.f32 %v892, %v908
    %v925 = vmax.f32 %v893, %v909
    %v926 = vmax.f32 %v894, %v910
    %v927 = vmax.f32 %v895, %v911
    %v928 = vmax.f32 %v896, %v912
    %v929 = vmax.f32 %v897, %v913
    %v930 = vmax.f32 %v898, %v914
    %v931 = vmax.f32 %v899, %v915
    %v932 = vmax.f32 %v900, %v916
    %v933 = vmax.f32 %v901, %v917
    %v934 = vadd.f32 %v918, %v167
    %v935 = vadd.f32 %v919, %v168
    %v936 = vadd.f32 %v920, %v169
    %v937 = vadd.f32 %v921, %v170
    %v938 = vadd.f32 %v922, %v171
    %v939 = vadd.f32 %v923, %v172
    %v940 = vadd.f32 %v924, %v173
    %v941 = vadd.f32 %v925, %v174
    %v942 = vadd.f32 %v926, %v175
    %v943 = vadd.f32 %v927, %v176
    %v944 = vadd.f32 %v928, %v177
    %v945 = vadd.f32 %v929, %v178
    %v946 = vadd.f32 %v930, %v179
    %v947 = vadd.f32 %v931, %v180
    %v948 = vadd.f32 %v932, %v181
    %v949 = vadd.f32 %v933, %v182
    %950 = vmax.xlane.f32.xlu0 %v934
    %v951 = vpop.xlane.xlu0 %950
    %952 = vmax.xlane.f32.xlu0 %v935
    %v953 = vpop.xlane.xlu0 %952
    %954 = vmax.xlane.f32.xlu0 %v936
    %v955 = vpop.xlane.xlu0 %954
    %956 = vmax.xlane.f32.xlu0 %v937
    %v957 = vpop.xlane.xlu0 %956
    %958 = vmax.xlane.f32.xlu0 %v938
    %v959 = vpop.xlane.xlu0 %958
    %960 = vmax.xlane.f32.xlu0 %v939
    %v961 = vpop.xlane.xlu0 %960
    %962 = vmax.xlane.f32.xlu0 %v940
    %v963 = vpop.xlane.xlu0 %962
    %964 = vmax.xlane.f32.xlu0 %v941
    %v965 = vpop.xlane.xlu0 %964
    %966 = vmax.xlane.f32.xlu0 %v942
    %v967 = vpop.xlane.xlu0 %966
    %968 = vmax.xlane.f32.xlu0 %v943
    %v969 = vpop.xlane.xlu0 %968
    %970 = vmax.xlane.f32.xlu0 %v944
    %v971 = vpop.xlane.xlu0 %970
    %972 = vmax.xlane.f32.xlu0 %v945
    %v973 = vpop.xlane.xlu0 %972
    %974 = vmax.xlane.f32.xlu0 %v946
    %v975 = vpop.xlane.xlu0 %974
    %976 = vmax.xlane.f32.xlu0 %v947
    %v977 = vpop.xlane.xlu0 %976
    %978 = vmax.xlane.f32.xlu0 %v948
    %v979 = vpop.xlane.xlu0 %978
    %980 = vmax.xlane.f32.xlu0 %v949
    %v981 = vpop.xlane.xlu0 %980
    %v982 = vsub.f32 %v934, %v951
    %v983 = vsub.f32 %v935, %v953
    %v984 = vsub.f32 %v936, %v955
    %v985 = vsub.f32 %v937, %v957
    %v986 = vsub.f32 %v938, %v959
    %v987 = vsub.f32 %v939, %v961
    %v988 = vsub.f32 %v940, %v963
    %v989 = vsub.f32 %v941, %v965
    %v990 = vsub.f32 %v942, %v967
    %v991 = vsub.f32 %v943, %v969
    %v992 = vsub.f32 %v944, %v971
    %v993 = vsub.f32 %v945, %v973
    %v994 = vsub.f32 %v946, %v975
    %v995 = vsub.f32 %v947, %v977
    %v996 = vsub.f32 %v948, %v979
    %v997 = vsub.f32 %v949, %v981
    %v998 = vmul.f32 %v982, 1.442695
    %v999 = vpow.pop %v998
    %v1000 = vmul.f32 %v983, 1.442695
    %v1001 = vpow.pop %v1000
    %v1002 = vmul.f32 %v984, 1.442695
    %v1003 = vpow.pop %v1002
    %v1004 = vmul.f32 %v985, 1.442695
    %v1005 = vpow.pop %v1004
    %v1006 = vmul.f32 %v986, 1.442695
    %v1007 = vpow.pop %v1006
    %v1008 = vmul.f32 %v987, 1.442695
    %v1009 = vpow.pop %v1008
    %v1010 = vmul.f32 %v988, 1.442695
    %v1011 = vpow.pop %v1010
    %v1012 = vmul.f32 %v989, 1.442695
    %v1013 = vpow.pop %v1012
    %v1014 = vmul.f32 %v990, 1.442695
    %v1015 = vpow.pop %v1014
    %v1016 = vmul.f32 %v991, 1.442695
    %v1017 = vpow.pop %v1016
    %v1018 = vmul.f32 %v992, 1.442695
    %v1019 = vpow.pop %v1018
    %v1020 = vmul.f32 %v993, 1.442695
    %v1021 = vpow.pop %v1020
    %v1022 = vmul.f32 %v994, 1.442695
    %v1023 = vpow.pop %v1022
    %v1024 = vmul.f32 %v995, 1.442695
    %v1025 = vpow.pop %v1024
    %v1026 = vmul.f32 %v996, 1.442695
    %v1027 = vpow.pop %v1026
    %v1028 = vmul.f32 %v997, 1.442695
    %v1029 = vpow.pop %v1028
    %v1030 = vmul.f32 %v999, %v135
    %v1031 = vmul.f32 %v1001, %v136
    %v1032 = vmul.f32 %v1003, %v137
    %v1033 = vmul.f32 %v1005, %v138
    %v1034 = vmul.f32 %v1007, %v139
    %v1035 = vmul.f32 %v1009, %v140
    %v1036 = vmul.f32 %v1011, %v141
    %v1037 = vmul.f32 %v1013, %v142
    %v1038 = vmul.f32 %v1015, %v143
    %v1039 = vmul.f32 %v1017, %v144
    %v1040 = vmul.f32 %v1019, %v145
    %v1041 = vmul.f32 %v1021, %v146
    %v1042 = vmul.f32 %v1023, %v147
    %v1043 = vmul.f32 %v1025, %v148
    %v1044 = vmul.f32 %v1027, %v149
    %v1045 = vmul.f32 %v1029, %v150
    %1046 = vadd.xlane.f32.xlu0 %v1030
    %v1047 = vpop.xlane.xlu0 %1046
    %1048 = vadd.xlane.f32.xlu0 %v1031
    %v1049 = vpop.xlane.xlu0 %1048
    %1050 = vadd.xlane.f32.xlu0 %v1032
    %v1051 = vpop.xlane.xlu0 %1050
    %1052 = vadd.xlane.f32.xlu0 %v1033
    %v1053 = vpop.xlane.xlu0 %1052
    %1054 = vadd.xlane.f32.xlu0 %v1034
    %v1055 = vpop.xlane.xlu0 %1054
    %1056 = vadd.xlane.f32.xlu0 %v1035
    %v1057 = vpop.xlane.xlu0 %1056
    %1058 = vadd.xlane.f32.xlu0 %v1036
    %v1059 = vpop.xlane.xlu0 %1058
    %1060 = vadd.xlane.f32.xlu0 %v1037
    %v1061 = vpop.xlane.xlu0 %1060
    %1062 = vadd.xlane.f32.xlu0 %v1038
    %v1063 = vpop.xlane.xlu0 %1062
    %1064 = vadd.xlane.f32.xlu0 %v1039
    %v1065 = vpop.xlane.xlu0 %1064
    %1066 = vadd.xlane.f32.xlu0 %v1040
    %v1067 = vpop.xlane.xlu0 %1066
    %1068 = vadd.xlane.f32.xlu0 %v1041
    %v1069 = vpop.xlane.xlu0 %1068
    %1070 = vadd.xlane.f32.xlu0 %v1042
    %v1071 = vpop.xlane.xlu0 %1070
    %1072 = vadd.xlane.f32.xlu0 %v1043
    %v1073 = vpop.xlane.xlu0 %1072
    %1074 = vadd.xlane.f32.xlu0 %v1044
    %v1075 = vpop.xlane.xlu0 %1074
    %1076 = vadd.xlane.f32.xlu0 %v1045
    %v1077 = vpop.xlane.xlu0 %1076
    %v1078 = vmax.f32 %v1047, 1e-30
    %v1079 = vmax.f32 %v1049, 1e-30
    %v1080 = vmax.f32 %v1051, 1e-30
    %v1081 = vmax.f32 %v1053, 1e-30
    %v1082 = vmax.f32 %v1055, 1e-30
    %v1083 = vmax.f32 %v1057, 1e-30
    %v1084 = vmax.f32 %v1059, 1e-30
    %v1085 = vmax.f32 %v1061, 1e-30
    %v1086 = vmax.f32 %v1063, 1e-30
    %v1087 = vmax.f32 %v1065, 1e-30
    %v1088 = vmax.f32 %v1067, 1e-30
    %v1089 = vmax.f32 %v1069, 1e-30
    %v1090 = vmax.f32 %v1071, 1e-30
    %v1091 = vmax.f32 %v1073, 1e-30
    %v1092 = vmax.f32 %v1075, 1e-30
    %v1093 = vmax.f32 %v1077, 1e-30
    %v1094 = vrcp.pop %v1078
    %v1095 = vrcp.pop %v1079
    %v1096 = vrcp.pop %v1080
    %v1097 = vrcp.pop %v1081
    %v1098 = vrcp.pop %v1082
    %v1099 = vrcp.pop %v1083
    %v1100 = vrcp.pop %v1084
    %v1101 = vrcp.pop %v1085
    %v1102 = vrcp.pop %v1086
    %v1103 = vrcp.pop %v1087
    %v1104 = vrcp.pop %v1088
    %v1105 = vrcp.pop %v1089
    %v1106 = vrcp.pop %v1090
    %v1107 = vrcp.pop %v1091
    %v1108 = vrcp.pop %v1092
    %v1109 = vrcp.pop %v1093
    %v1110 = vmul.f32 %v1030, %v1094
    %v1111 = vmul.f32 %v1031, %v1095
    %v1112 = vmul.f32 %v1032, %v1096
    %v1113 = vmul.f32 %v1033, %v1097
    %v1114 = vmul.f32 %v1034, %v1098
    %v1115 = vmul.f32 %v1035, %v1099
    %v1116 = vmul.f32 %v1036, %v1100
    %v1117 = vmul.f32 %v1037, %v1101
    %v1118 = vmul.f32 %v1038, %v1102
    %v1119 = vmul.f32 %v1039, %v1103
    %v1120 = vmul.f32 %v1040, %v1104
    %v1121 = vmul.f32 %v1041, %v1105
    %v1122 = vmul.f32 %v1042, %v1106
    %v1123 = vmul.f32 %v1043, %v1107
    %v1124 = vmul.f32 %v1044, %v1108
    %v1125 = vmul.f32 %v1045, %v1109
    %1126 = vmatpush.msra.mxu0 %v783
    %1127 = vmatpush.msra.mxu0 %v780
    %1128 = vmatpush.msra.mxu0 %v777
    %1129 = vmatpush.msra.mxu0 %v774
    %1130 = vmatpush.msra.mxu0 %v771
    %1131 = vmatpush.msra.mxu0 %v768
    %1132 = vmatpush.msra.mxu0 %v765
    %1133 = vmatpush.msra.mxu0 %v762
    %1134 = vmatpush.msra.mxu0 %v759
    %1135 = vmatpush.msra.mxu0 %v756
    %1136 = vmatpush.msra.mxu0 %v753
    %1137 = vmatpush.msra.mxu0 %v750
    %1138 = vmatpush.msra.mxu0 %v747
    %1139 = vmatpush.msra.mxu0 %v744
    %1140 = vmatpush.msra.mxu0 %v741
    %1141 = vmatpush.msra.mxu0 %v738
    %1142 = vmatmul.f32.gmra.mxu0 %v1110
    %v1143 = vpop.f32.mrf.mxu0
    %v1144 = vadd.f32 0.0, %v1143
    %1145 = vmatmul.f32.gmra.mxu0 %v1111
    %v1146 = vpop.f32.mrf.mxu0
    %v1147 = vadd.f32 0.0, %v1146
    %1148 = vmatmul.f32.gmra.mxu0 %v1112
    %v1149 = vpop.f32.mrf.mxu0
    %v1150 = vadd.f32 0.0, %v1149
    %1151 = vmatmul.f32.gmra.mxu0 %v1113
    %v1152 = vpop.f32.mrf.mxu0
    %v1153 = vadd.f32 0.0, %v1152
    %1154 = vmatmul.f32.gmra.mxu0 %v1114
    %v1155 = vpop.f32.mrf.mxu0
    %v1156 = vadd.f32 0.0, %v1155
    %1157 = vmatmul.f32.gmra.mxu0 %v1115
    %v1158 = vpop.f32.mrf.mxu0
    %v1159 = vadd.f32 0.0, %v1158
    %1160 = vmatmul.f32.gmra.mxu0 %v1116
    %v1161 = vpop.f32.mrf.mxu0
    %v1162 = vadd.f32 0.0, %v1161
    %1163 = vmatmul.f32.gmra.mxu0 %v1117
    %v1164 = vpop.f32.mrf.mxu0
    %v1165 = vadd.f32 0.0, %v1164
    %1166 = vmatmul.f32.gmra.mxu0 %v1118
    %v1167 = vpop.f32.mrf.mxu0
    %v1168 = vadd.f32 0.0, %v1167
    %1169 = vmatmul.f32.gmra.mxu0 %v1119
    %v1170 = vpop.f32.mrf.mxu0
    %v1171 = vadd.f32 0.0, %v1170
    %1172 = vmatmul.f32.gmra.mxu0 %v1120
    %v1173 = vpop.f32.mrf.mxu0
    %v1174 = vadd.f32 0.0, %v1173
    %1175 = vmatmul.f32.gmra.mxu0 %v1121
    %v1176 = vpop.f32.mrf.mxu0
    %v1177 = vadd.f32 0.0, %v1176
    %1178 = vmatmul.f32.gmra.mxu0 %v1122
    %v1179 = vpop.f32.mrf.mxu0
    %v1180 = vadd.f32 0.0, %v1179
    %1181 = vmatmul.f32.gmra.mxu0 %v1123
    %v1182 = vpop.f32.mrf.mxu0
    %v1183 = vadd.f32 0.0, %v1182
    %1184 = vmatmul.f32.gmra.mxu0 %v1124
    %v1185 = vpop.f32.mrf.mxu0
    %v1186 = vadd.f32 0.0, %v1185
    %1187 = vmatmul.f32.gmra.mxu0 %v1125
    %v1188 = vpop.f32.mrf.mxu0
    %v1189 = vadd.f32 0.0, %v1188
    %1190 = vdwg.mxu0
    %v1191 = vmax.f32 %v1144, 0.0
    %v1192 = vmax.f32 %v1147, 0.0
    %v1193 = vmax.f32 %v1150, 0.0
    %v1194 = vmax.f32 %v1153, 0.0
    %v1195 = vmax.f32 %v1156, 0.0
    %v1196 = vmax.f32 %v1159, 0.0
    %v1197 = vmax.f32 %v1162, 0.0
    %v1198 = vmax.f32 %v1165, 0.0
    %v1199 = vmax.f32 %v1168, 0.0
    %v1200 = vmax.f32 %v1171, 0.0
    %v1201 = vmax.f32 %v1174, 0.0
    %v1202 = vmax.f32 %v1177, 0.0
    %v1203 = vmax.f32 %v1180, 0.0
    %v1204 = vmax.f32 %v1183, 0.0
    %v1205 = vmax.f32 %v1186, 0.0
    %v1206 = vmax.f32 %v1189, 0.0
    %v1207 = vld [vmem:[#allocation13] sm:$0xff]
    %v1208 = vld [vmem:[#allocation13 + $0x8] sm:$0xff]
    %v1209 = vld [vmem:[#allocation13 + $0x10] sm:$0xff]
    %v1210 = vld [vmem:[#allocation13 + $0x18] sm:$0xff]
    %v1211 = vld [vmem:[#allocation13 + $0x20] sm:$0xff]
    %v1212 = vld [vmem:[#allocation13 + $0x28] sm:$0xff]
    %v1213 = vld [vmem:[#allocation13 + $0x30] sm:$0xff]
    %v1214 = vld [vmem:[#allocation13 + $0x38] sm:$0xff]
    %v1215 = vld [vmem:[#allocation13 + $0x40] sm:$0xff]
    %v1216 = vld [vmem:[#allocation13 + $0x48] sm:$0xff]
    %v1217 = vld [vmem:[#allocation13 + $0x50] sm:$0xff]
    %v1218 = vld [vmem:[#allocation13 + $0x58] sm:$0xff]
    %v1219 = vld [vmem:[#allocation13 + $0x60] sm:$0xff]
    %v1220 = vld [vmem:[#allocation13 + $0x68] sm:$0xff]
    %v1221 = vld [vmem:[#allocation13 + $0x70] sm:$0xff]
    %v1222 = vld [vmem:[#allocation13 + $0x78] sm:$0xff]
    %v1223 = vld [vmem:[%s7] sm:$0x1]
    %v1225 = vperm.slane %v1223, 0
    %1227 = vmatpush.msra.mxu0 %v1222
    %1228 = vmatpush.msra.mxu0 %v1221
    %1229 = vmatpush.msra.mxu0 %v1220
    %1230 = vmatpush.msra.mxu0 %v1219
    %1231 = vmatpush.msra.mxu0 %v1218
    %1232 = vmatpush.msra.mxu0 %v1217
    %1233 = vmatpush.msra.mxu0 %v1216
    %1234 = vmatpush.msra.mxu0 %v1215
    %1235 = vmatpush.msra.mxu0 %v1214
    %1236 = vmatpush.msra.mxu0 %v1213
    %1237 = vmatpush.msra.mxu0 %v1212
    %1238 = vmatpush.msra.mxu0 %v1211
    %1239 = vmatpush.msra.mxu0 %v1210
    %1240 = vmatpush.msra.mxu0 %v1209
    %1241 = vmatpush.msra.mxu0 %v1208
    %1242 = vmatpush.msra.mxu0 %v1207
    %1243 = vmatmul.f32.gmra.mxu0 %v1191
    %v1244 = vpop.f32.mrf.mxu0
    %v1245 = vadd.f32 %v1225, %v1244
    %1246 = vmatmul.f32.gmra.mxu0 %v1192
    %v1247 = vpop.f32.mrf.mxu0
    %v1248 = vadd.f32 %v1225, %v1247
    %1249 = vmatmul.f32.gmra.mxu0 %v1193
    %v1250 = vpop.f32.mrf.mxu0
    %v1251 = vadd.f32 %v1225, %v1250
    %1252 = vmatmul.f32.gmra.mxu0 %v1194
    %v1253 = vpop.f32.mrf.mxu0
    %v1254 = vadd.f32 %v1225, %v1253
    %1255 = vmatmul.f32.gmra.mxu0 %v1195
    %v1256 = vpop.f32.mrf.mxu0
    %v1257 = vadd.f32 %v1225, %v1256
    %1258 = vmatmul.f32.gmra.mxu0 %v1196
    %v1259 = vpop.f32.mrf.mxu0
    %v1260 = vadd.f32 %v1225, %v1259
    %1261 = vmatmul.f32.gmra.mxu0 %v1197
    %v1262 = vpop.f32.mrf.mxu0
    %v1263 = vadd.f32 %v1225, %v1262
    %1264 = vmatmul.f32.gmra.mxu0 %v1198
    %v1265 = vpop.f32.mrf.mxu0
    %v1266 = vadd.f32 %v1225, %v1265
    %1267 = vmatmul.f32.gmra.mxu0 %v1199
    %v1268 = vpop.f32.mrf.mxu0
    %v1269 = vadd.f32 %v1225, %v1268
    %1270 = vmatmul.f32.gmra.mxu0 %v1200
    %v1271 = vpop.f32.mrf.mxu0
    %v1272 = vadd.f32 %v1225, %v1271
    %1273 = vmatmul.f32.gmra.mxu0 %v1201
    %v1274 = vpop.f32.mrf.mxu0
    %v1275 = vadd.f32 %v1225, %v1274
    %1276 = vmatmul.f32.gmra.mxu0 %v1202
    %v1277 = vpop.f32.mrf.mxu0
    %v1278 = vadd.f32 %v1225, %v1277
    %1279 = vmatmul.f32.gmra.mxu0 %v1203
    %v1280 = vpop.f32.mrf.mxu0
    %v1281 = vadd.f32 %v1225, %v1280
    %1282 = vmatmul.f32.gmra.mxu0 %v1204
    %v1283 = vpop.f32.mrf.mxu0
    %v1284 = vadd.f32 %v1225, %v1283
    %1285 = vmatmul.f32.gmra.mxu0 %v1205
    %v1286 = vpop.f32.mrf.mxu0
    %v1287 = vadd.f32 %v1225, %v1286
    %1288 = vmatmul.f32.gmra.mxu0 %v1206
    %v1289 = vpop.f32.mrf.mxu0
    %v1290 = vadd.f32 %v1225, %v1289
    %1291 = vdwg.mxu0
    %1292 = vmax.xlane.f32.xlu0 %v1245
    %v1293 = vpop.xlane.xlu0 %1292
    %1294 = vmax.xlane.f32.xlu0 %v1248
    %v1295 = vpop.xlane.xlu0 %1294
    %1296 = vmax.xlane.f32.xlu0 %v1251
    %v1297 = vpop.xlane.xlu0 %1296
    %1298 = vmax.xlane.f32.xlu0 %v1254
    %v1299 = vpop.xlane.xlu0 %1298
    %1300 = vmax.xlane.f32.xlu0 %v1257
    %v1301 = vpop.xlane.xlu0 %1300
    %1302 = vmax.xlane.f32.xlu0 %v1260
    %v1303 = vpop.xlane.xlu0 %1302
    %1304 = vmax.xlane.f32.xlu0 %v1263
    %v1305 = vpop.xlane.xlu0 %1304
    %1306 = vmax.xlane.f32.xlu0 %v1266
    %v1307 = vpop.xlane.xlu0 %1306
    %1308 = vmax.xlane.f32.xlu0 %v1269
    %v1309 = vpop.xlane.xlu0 %1308
    %1310 = vmax.xlane.f32.xlu0 %v1272
    %v1311 = vpop.xlane.xlu0 %1310
    %1312 = vmax.xlane.f32.xlu0 %v1275
    %v1313 = vpop.xlane.xlu0 %1312
    %1314 = vmax.xlane.f32.xlu0 %v1278
    %v1315 = vpop.xlane.xlu0 %1314
    %1316 = vmax.xlane.f32.xlu0 %v1281
    %v1317 = vpop.xlane.xlu0 %1316
    %1318 = vmax.xlane.f32.xlu0 %v1284
    %v1319 = vpop.xlane.xlu0 %1318
    %1320 = vmax.xlane.f32.xlu0 %v1287
    %v1321 = vpop.xlane.xlu0 %1320
    %1322 = vmax.xlane.f32.xlu0 %v1290
    %v1323 = vpop.xlane.xlu0 %1322
    %v1324 = vsub.f32 %v1245, %v1293
    %v1325 = vsub.f32 %v1248, %v1295
    %v1326 = vsub.f32 %v1251, %v1297
    %v1327 = vsub.f32 %v1254, %v1299
    %v1328 = vsub.f32 %v1257, %v1301
    %v1329 = vsub.f32 %v1260, %v1303
    %v1330 = vsub.f32 %v1263, %v1305
    %v1331 = vsub.f32 %v1266, %v1307
    %v1332 = vsub.f32 %v1269, %v1309
    %v1333 = vsub.f32 %v1272, %v1311
    %v1334 = vsub.f32 %v1275, %v1313
    %v1335 = vsub.f32 %v1278, %v1315
    %v1336 = vsub.f32 %v1281, %v1317
    %v1337 = vsub.f32 %v1284, %v1319
    %v1338 = vsub.f32 %v1287, %v1321
    %v1339 = vsub.f32 %v1290, %v1323
    %v1340 = vmul.f32 %v1324, 1.442695
    %v1341 = vpow.pop %v1340
    %v1342 = vmul.f32 %v1325, 1.442695
    %v1343 = vpow.pop %v1342
    %v1344 = vmul.f32 %v1326, 1.442695
    %v1345 = vpow.pop %v1344
    %v1346 = vmul.f32 %v1327, 1.442695
    %v1347 = vpow.pop %v1346
    %v1348 = vmul.f32 %v1328, 1.442695
    %v1349 = vpow.pop %v1348
    %v1350 = vmul.f32 %v1329, 1.442695
    %v1351 = vpow.pop %v1350
    %v1352 = vmul.f32 %v1330, 1.442695
    %v1353 = vpow.pop %v1352
    %v1354 = vmul.f32 %v1331, 1.442695
    %v1355 = vpow.pop %v1354
    %v1356 = vmul.f32 %v1332, 1.442695
    %v1357 = vpow.pop %v1356
    %v1358 = vmul.f32 %v1333, 1.442695
    %v1359 = vpow.pop %v1358
    %v1360 = vmul.f32 %v1334, 1.442695
    %v1361 = vpow.pop %v1360
    %v1362 = vmul.f32 %v1335, 1.442695
    %v1363 = vpow.pop %v1362
    %v1364 = vmul.f32 %v1336, 1.442695
    %v1365 = vpow.pop %v1364
    %v1366 = vmul.f32 %v1337, 1.442695
    %v1367 = vpow.pop %v1366
    %v1368 = vmul.f32 %v1338, 1.442695
    %v1369 = vpow.pop %v1368
    %v1370 = vmul.f32 %v1339, 1.442695
    %v1371 = vpow.pop %v1370
    %1372 = vadd.xlane.f32.xlu0 %v1341
    %v1373 = vpop.xlane.xlu0 %1372
    %1374 = vadd.xlane.f32.xlu0 %v1343
    %v1375 = vpop.xlane.xlu0 %1374
    %1376 = vadd.xlane.f32.xlu0 %v1345
    %v1377 = vpop.xlane.xlu0 %1376
    %1378 = vadd.xlane.f32.xlu0 %v1347
    %v1379 = vpop.xlane.xlu0 %1378
    %1380 = vadd.xlane.f32.xlu0 %v1349
    %v1381 = vpop.xlane.xlu0 %1380
    %1382 = vadd.xlane.f32.xlu0 %v1351
    %v1383 = vpop.xlane.xlu0 %1382
    %1384 = vadd.xlane.f32.xlu0 %v1353
    %v1385 = vpop.xlane.xlu0 %1384
    %1386 = vadd.xlane.f32.xlu0 %v1355
    %v1387 = vpop.xlane.xlu0 %1386
    %1388 = vadd.xlane.f32.xlu0 %v1357
    %v1389 = vpop.xlane.xlu0 %1388
    %1390 = vadd.xlane.f32.xlu0 %v1359
    %v1391 = vpop.xlane.xlu0 %1390
    %1392 = vadd.xlane.f32.xlu0 %v1361
    %v1393 = vpop.xlane.xlu0 %1392
    %1394 = vadd.xlane.f32.xlu0 %v1363
    %v1395 = vpop.xlane.xlu0 %1394
    %1396 = vadd.xlane.f32.xlu0 %v1365
    %v1397 = vpop.xlane.xlu0 %1396
    %1398 = vadd.xlane.f32.xlu0 %v1367
    %v1399 = vpop.xlane.xlu0 %1398
    %1400 = vadd.xlane.f32.xlu0 %v1369
    %v1401 = vpop.xlane.xlu0 %1400
    %1402 = vadd.xlane.f32.xlu0 %v1371
    %v1403 = vpop.xlane.xlu0 %1402
    %v1404 = vrcp.pop %v1373
    %v1405 = vmul.f32 %v1373, %v1404
    %v1406 = vsub.f32 1.0, %v1405
    %v1407 = vmul.f32 %v1404, %v1406
    %v1408 = vadd.f32 %v1404, %v1407
    %vm1409 = vweird.f32 %v1373
    %vm1410 = vweird.f32 %v1404
    %vm1411 = vmor %vm1409, %vm1410
    %v1412 = vsel %vm1411, %v1404, %v1408
    %v1413 = vand.u32 2147483647, %v1373
    %vm1414 = vcmp.eq.f32.partialorder %v1413, 8.507059e+37
    %v1415 = vand.u32 %v1373, 2147483648
    %v1416 = vor.u32 1.1754944e-38, %v1415
    %v1417 = vsel %vm1414, %v1416, %v1412
    %v1418 = vrcp.pop %v1375
    %v1419 = vmul.f32 %v1375, %v1418
    %v1420 = vsub.f32 1.0, %v1419
    %v1421 = vmul.f32 %v1418, %v1420
    %v1422 = vadd.f32 %v1418, %v1421
    %vm1423 = vweird.f32 %v1375
    %vm1424 = vweird.f32 %v1418
    %vm1425 = vmor %vm1423, %vm1424
    %v1426 = vsel %vm1425, %v1418, %v1422
    %v1427 = vand.u32 2147483647, %v1375
    %vm1428 = vcmp.eq.f32.partialorder %v1427, 8.507059e+37
    %v1429 = vand.u32 %v1375, 2147483648
    %v1430 = vor.u32 1.1754944e-38, %v1429
    %v1431 = vsel %vm1428, %v1430, %v1426
    %v1432 = vrcp.pop %v1377
    %v1433 = vmul.f32 %v1377, %v1432
    %v1434 = vsub.f32 1.0, %v1433
    %v1435 = vmul.f32 %v1432, %v1434
    %v1436 = vadd.f32 %v1432, %v1435
    %vm1437 = vweird.f32 %v1377
    %vm1438 = vweird.f32 %v1432
    %vm1439 = vmor %vm1437, %vm1438
    %v1440 = vsel %vm1439, %v1432, %v1436
    %v1441 = vand.u32 2147483647, %v1377
    %vm1442 = vcmp.eq.f32.partialorder %v1441, 8.507059e+37
    %v1443 = vand.u32 %v1377, 2147483648
    %v1444 = vor.u32 1.1754944e-38, %v1443
    %v1445 = vsel %vm1442, %v1444, %v1440
    %v1446 = vrcp.pop %v1379
    %v1447 = vmul.f32 %v1379, %v1446
    %v1448 = vsub.f32 1.0, %v1447
    %v1449 = vmul.f32 %v1446, %v1448
    %v1450 = vadd.f32 %v1446, %v1449
    %vm1451 = vweird.f32 %v1379
    %vm1452 = vweird.f32 %v1446
    %vm1453 = vmor %vm1451, %vm1452
    %v1454 = vsel %vm1453, %v1446, %v1450
    %v1455 = vand.u32 2147483647, %v1379
    %vm1456 = vcmp.eq.f32.partialorder %v1455, 8.507059e+37
    %v1457 = vand.u32 %v1379, 2147483648
    %v1458 = vor.u32 1.1754944e-38, %v1457
    %v1459 = vsel %vm1456, %v1458, %v1454
    %v1460 = vrcp.pop %v1381
    %v1461 = vmul.f32 %v1381, %v1460
    %v1462 = vsub.f32 1.0, %v1461
    %v1463 = vmul.f32 %v1460, %v1462
    %v1464 = vadd.f32 %v1460, %v1463
    %vm1465 = vweird.f32 %v1381
    %vm1466 = vweird.f32 %v1460
    %vm1467 = vmor %vm1465, %vm1466
    %v1468 = vsel %vm1467, %v1460, %v1464
    %v1469 = vand.u32 2147483647, %v1381
    %vm1470 = vcmp.eq.f32.partialorder %v1469, 8.507059e+37
    %v1471 = vand.u32 %v1381, 2147483648
    %v1472 = vor.u32 1.1754944e-38, %v1471
    %v1473 = vsel %vm1470, %v1472, %v1468
    %v1474 = vrcp.pop %v1383
    %v1475 = vmul.f32 %v1383, %v1474
    %v1476 = vsub.f32 1.0, %v1475
    %v1477 = vmul.f32 %v1474, %v1476
    %v1478 = vadd.f32 %v1474, %v1477
    %vm1479 = vweird.f32 %v1383
    %vm1480 = vweird.f32 %v1474
    %vm1481 = vmor %vm1479, %vm1480
    %v1482 = vsel %vm1481, %v1474, %v1478
    %v1483 = vand.u32 2147483647, %v1383
    %vm1484 = vcmp.eq.f32.partialorder %v1483, 8.507059e+37
    %v1485 = vand.u32 %v1383, 2147483648
    %v1486 = vor.u32 1.1754944e-38, %v1485
    %v1487 = vsel %vm1484, %v1486, %v1482
    %v1488 = vrcp.pop %v1385
    %v1489 = vmul.f32 %v1385, %v1488
    %v1490 = vsub.f32 1.0, %v1489
    %v1491 = vmul.f32 %v1488, %v1490
    %v1492 = vadd.f32 %v1488, %v1491
    %vm1493 = vweird.f32 %v1385
    %vm1494 = vweird.f32 %v1488
    %vm1495 = vmor %vm1493, %vm1494
    %v1496 = vsel %vm1495, %v1488, %v1492
    %v1497 = vand.u32 2147483647, %v1385
    %vm1498 = vcmp.eq.f32.partialorder %v1497, 8.507059e+37
    %v1499 = vand.u32 %v1385, 2147483648
    %v1500 = vor.u32 1.1754944e-38, %v1499
    %v1501 = vsel %vm1498, %v1500, %v1496
    %v1502 = vrcp.pop %v1387
    %v1503 = vmul.f32 %v1387, %v1502
    %v1504 = vsub.f32 1.0, %v1503
    %v1505 = vmul.f32 %v1502, %v1504
    %v1506 = vadd.f32 %v1502, %v1505
    %vm1507 = vweird.f32 %v1387
    %vm1508 = vweird.f32 %v1502
    %vm1509 = vmor %vm1507, %vm1508
    %v1510 = vsel %vm1509, %v1502, %v1506
    %v1511 = vand.u32 2147483647, %v1387
    %vm1512 = vcmp.eq.f32.partialorder %v1511, 8.507059e+37
    %v1513 = vand.u32 %v1387, 2147483648
    %v1514 = vor.u32 1.1754944e-38, %v1513
    %v1515 = vsel %vm1512, %v1514, %v1510
    %v1516 = vrcp.pop %v1389
    %v1517 = vmul.f32 %v1389, %v1516
    %v1518 = vsub.f32 1.0, %v1517
    %v1519 = vmul.f32 %v1516, %v1518
    %v1520 = vadd.f32 %v1516, %v1519
    %vm1521 = vweird.f32 %v1389
    %vm1522 = vweird.f32 %v1516
    %vm1523 = vmor %vm1521, %vm1522
    %v1524 = vsel %vm1523, %v1516, %v1520
    %v1525 = vand.u32 2147483647, %v1389
    %vm1526 = vcmp.eq.f32.partialorder %v1525, 8.507059e+37
    %v1527 = vand.u32 %v1389, 2147483648
    %v1528 = vor.u32 1.1754944e-38, %v1527
    %v1529 = vsel %vm1526, %v1528, %v1524
    %v1530 = vrcp.pop %v1391
    %v1531 = vmul.f32 %v1391, %v1530
    %v1532 = vsub.f32 1.0, %v1531
    %v1533 = vmul.f32 %v1530, %v1532
    %v1534 = vadd.f32 %v1530, %v1533
    %vm1535 = vweird.f32 %v1391
    %vm1536 = vweird.f32 %v1530
    %vm1537 = vmor %vm1535, %vm1536
    %v1538 = vsel %vm1537, %v1530, %v1534
    %v1539 = vand.u32 2147483647, %v1391
    %vm1540 = vcmp.eq.f32.partialorder %v1539, 8.507059e+37
    %v1541 = vand.u32 %v1391, 2147483648
    %v1542 = vor.u32 1.1754944e-38, %v1541
    %v1543 = vsel %vm1540, %v1542, %v1538
    %v1544 = vrcp.pop %v1393
    %v1545 = vmul.f32 %v1393, %v1544
    %v1546 = vsub.f32 1.0, %v1545
    %v1547 = vmul.f32 %v1544, %v1546
    %v1548 = vadd.f32 %v1544, %v1547
    %vm1549 = vweird.f32 %v1393
    %vm1550 = vweird.f32 %v1544
    %vm1551 = vmor %vm1549, %vm1550
    %v1552 = vsel %vm1551, %v1544, %v1548
    %v1553 = vand.u32 2147483647, %v1393
    %vm1554 = vcmp.eq.f32.partialorder %v1553, 8.507059e+37
    %v1555 = vand.u32 %v1393, 2147483648
    %v1556 = vor.u32 1.1754944e-38, %v1555
    %v1557 = vsel %vm1554, %v1556, %v1552
    %v1558 = vrcp.pop %v1395
    %v1559 = vmul.f32 %v1395, %v1558
    %v1560 = vsub.f32 1.0, %v1559
    %v1561 = vmul.f32 %v1558, %v1560
    %v1562 = vadd.f32 %v1558, %v1561
    %vm1563 = vweird.f32 %v1395
    %vm1564 = vweird.f32 %v1558
    %vm1565 = vmor %vm1563, %vm1564
    %v1566 = vsel %vm1565, %v1558, %v1562
    %v1567 = vand.u32 2147483647, %v1395
    %vm1568 = vcmp.eq.f32.partialorder %v1567, 8.507059e+37
    %v1569 = vand.u32 %v1395, 2147483648
    %v1570 = vor.u32 1.1754944e-38, %v1569
    %v1571 = vsel %vm1568, %v1570, %v1566
    %v1572 = vrcp.pop %v1397
    %v1573 = vmul.f32 %v1397, %v1572
    %v1574 = vsub.f32 1.0, %v1573
    %v1575 = vmul.f32 %v1572, %v1574
    %v1576 = vadd.f32 %v1572, %v1575
    %vm1577 = vweird.f32 %v1397
    %vm1578 = vweird.f32 %v1572
    %vm1579 = vmor %vm1577, %vm1578
    %v1580 = vsel %vm1579, %v1572, %v1576
    %v1581 = vand.u32 2147483647, %v1397
    %vm1582 = vcmp.eq.f32.partialorder %v1581, 8.507059e+37
    %v1583 = vand.u32 %v1397, 2147483648
    %v1584 = vor.u32 1.1754944e-38, %v1583
    %v1585 = vsel %vm1582, %v1584, %v1580
    %v1586 = vrcp.pop %v1399
    %v1587 = vmul.f32 %v1399, %v1586
    %v1588 = vsub.f32 1.0, %v1587
    %v1589 = vmul.f32 %v1586, %v1588
    %v1590 = vadd.f32 %v1586, %v1589
    %vm1591 = vweird.f32 %v1399
    %vm1592 = vweird.f32 %v1586
    %vm1593 = vmor %vm1591, %vm1592
    %v1594 = vsel %vm1593, %v1586, %v1590
    %v1595 = vand.u32 2147483647, %v1399
    %vm1596 = vcmp.eq.f32.partialorder %v1595, 8.507059e+37
    %v1597 = vand.u32 %v1399, 2147483648
    %v1598 = vor.u32 1.1754944e-38, %v1597
    %v1599 = vsel %vm1596, %v1598, %v1594
    %v1600 = vrcp.pop %v1401
    %v1601 = vmul.f32 %v1401, %v1600
    %v1602 = vsub.f32 1.0, %v1601
    %v1603 = vmul.f32 %v1600, %v1602
    %v1604 = vadd.f32 %v1600, %v1603
    %vm1605 = vweird.f32 %v1401
    %vm1606 = vweird.f32 %v1600
    %vm1607 = vmor %vm1605, %vm1606
    %v1608 = vsel %vm1607, %v1600, %v1604
    %v1609 = vand.u32 2147483647, %v1401
    %vm1610 = vcmp.eq.f32.partialorder %v1609, 8.507059e+37
    %v1611 = vand.u32 %v1401, 2147483648
    %v1612 = vor.u32 1.1754944e-38, %v1611
    %v1613 = vsel %vm1610, %v1612, %v1608
    %v1614 = vrcp.pop %v1403
    %v1615 = vmul.f32 %v1403, %v1614
    %v1616 = vsub.f32 1.0, %v1615
    %v1617 = vmul.f32 %v1614, %v1616
    %v1618 = vadd.f32 %v1614, %v1617
    %vm1619 = vweird.f32 %v1403
    %vm1620 = vweird.f32 %v1614
    %vm1621 = vmor %vm1619, %vm1620
    %v1622 = vsel %vm1621, %v1614, %v1618
    %v1623 = vand.u32 2147483647, %v1403
    %vm1624 = vcmp.eq.f32.partialorder %v1623, 8.507059e+37
    %v1625 = vand.u32 %v1403, 2147483648
    %v1626 = vor.u32 1.1754944e-38, %v1625
    %v1627 = vsel %vm1624, %v1626, %v1622
    %v1628 = vmul.f32 %v1341, %v1417
    %v1629 = vmul.f32 %v1343, %v1431
    %v1630 = vmul.f32 %v1345, %v1445
    %v1631 = vmul.f32 %v1347, %v1459
    %v1632 = vmul.f32 %v1349, %v1473
    %v1633 = vmul.f32 %v1351, %v1487
    %v1634 = vmul.f32 %v1353, %v1501
    %v1635 = vmul.f32 %v1355, %v1515
    %v1636 = vmul.f32 %v1357, %v1529
    %v1637 = vmul.f32 %v1359, %v1543
    %v1638 = vmul.f32 %v1361, %v1557
    %v1639 = vmul.f32 %v1363, %v1571
    %v1640 = vmul.f32 %v1365, %v1585
    %v1641 = vmul.f32 %v1367, %v1599
    %v1642 = vmul.f32 %v1369, %v1613
    %v1643 = vmul.f32 %v1371, %v1627
    %1644 = vst [vmem:[#allocation14] sm:$0xff] %v1628
    %1645 = vst [vmem:[#allocation14 + $0x8] sm:$0xff] %v1629
    %1646 = vst [vmem:[#allocation14 + $0x10] sm:$0xff] %v1630
    %1647 = vst [vmem:[#allocation14 + $0x18] sm:$0xff] %v1631
    %1648 = vst [vmem:[#allocation14 + $0x20] sm:$0xff] %v1632
    %1649 = vst [vmem:[#allocation14 + $0x28] sm:$0xff] %v1633
    %1650 = vst [vmem:[#allocation14 + $0x30] sm:$0xff] %v1634
    %1651 = vst [vmem:[#allocation14 + $0x38] sm:$0xff] %v1635
    %1652 = vst [vmem:[#allocation14 + $0x40] sm:$0xff] %v1636
    %1653 = vst [vmem:[#allocation14 + $0x48] sm:$0xff] %v1637
    %1654 = vst [vmem:[#allocation14 + $0x50] sm:$0xff] %v1638
    %1655 = vst [vmem:[#allocation14 + $0x58] sm:$0xff] %v1639
    %1656 = vst [vmem:[#allocation14 + $0x60] sm:$0xff] %v1640
    %1657 = vst [vmem:[#allocation14 + $0x68] sm:$0xff] %v1641
    %1658 = vst [vmem:[#allocation14 + $0x70] sm:$0xff] %v1642
    %1659 = vst [vmem:[#allocation14 + $0x78] sm:$0xff] %v1643
    // Predicated region
    $region62: #{tpu_custom_call.1} parent=1 // pred_check
      _
    $region63: #{tpu_custom_call.1} parent=1 // pred_check_branch
      %1661 = sbr.rel (0) target = $region65
    $region64: #{tpu_custom_call.1} parent=1 // pred_region
      %1663 = vsyncadd [#allocation4], 0
      %s1664 = sshll.u32 [#allocation14], 4
      %s1665 = int_to_ptr.vmem [resolvable:$true] %s1664
      %s1666 = sshll.u32 %s8, 4
      %s1667 = int_to_ptr.hbm [resolvable:$true] %s1666
      %1672 = dma.vmem_to_hbm [thread:$0]  %s1665, 2048, %s1667, [#allocation4], 128, 128, 8
    $region65: #{tpu_custom_call.1} parent=1 // pred_fallthru
      _
    // Predicated region
    $region66: #{tpu_custom_call.1} parent=1 // pred_check
      _
    $region67: #{tpu_custom_call.1} parent=1 // pred_check_branch
      %1674 = sbr.rel (0) target = $region69
    $region68: #{tpu_custom_call.1} parent=1 // pred_region
      %1676 = dma.done [#allocation4], 2048
    $region69: #{tpu_custom_call.1} parent=1 // pred_fallthru
      _
    %1677 = vsyncpa [#allocation3], 1
    %1678 = vsyncpa [#allocation6], 1
    %1679 = vsyncpa [#allocation9], 1
    %1680 = vsyncpa [#allocation12], 1
    %1681 = vsyncpa [#allocation4], 1

</llo_original>
